<compile_context>
chip_gen: v7x
topology: tpu7x:2x2x1
jax: 0.10.0
libtpu: 0.0.40
codegen_flags: <defaults>
</compile_context>

<pallas_src>
import functools

import jax
import jax.numpy as jnp
from jax import lax
from jax.experimental import pallas as pl
from jax.experimental.pallas import tpu as pltpu

FILTER_SIZES = (3, 4, 5)
NUM_FILTERS = 100            # per branch (torch module)
F_PAD = 128                  # filter dim padded to a full lane tile
KMAX = max(FILTER_SIZES)     # fused tap count
NUM_BRANCH = len(FILTER_SIZES)
N_OUT = NUM_BRANCH * F_PAD   # 384 pooled-feature lanes


def _round_up(n, m):
    return ((n + m - 1) // m) * m


def _make_kernel(TB, Lv, L, c2p, c_pad):
    """Per-block kernel for static (TB, Lv, L, c2p, c_pad)."""

    def kernel(x_ref, w_ref, b_ref, wd_ref, bd_ref, out_ref):
        # x_ref  : [TB, L_pad, c2p]     bf16  (per-sequence zero-padded)
        # w_ref  : [KMAX*c2p, N_OUT]    bf16  im2col-fused conv weights
        # b_ref  : [1, N_OUT]           f32   fused conv bias
        # wd_ref : [N_OUT, c_pad]       f32   dense weights (lane padded)
        # bd_ref : [1, c_pad]           f32   dense bias
        # out_ref: [TB, c_pad]          f32   logits (lane dense)

        # --- conv as a single matmul: fold the 5 taps into the K dim --------
        xs = jnp.concatenate(
            [x_ref[:, dk:dk + Lv, :] for dk in range(KMAX)], axis=-1)
        xs2d = xs.reshape(TB * Lv, KMAX * c2p)
        acc = jnp.dot(xs2d, w_ref[...],
                      preferred_element_type=jnp.float32)   # [TB*Lv, N_OUT]

        # --- bias + ReLU once over the whole block (single broadcast) -------
        val = jnp.maximum(acc + b_ref[...], 0.0)
        val = val.reshape(TB, Lv, N_OUT)

        # Per-branch valid-length mask (zeroing masked positions is safe:
        # everything is post-ReLU >= 0, so zeros cannot win the max).
        t_idx = lax.broadcasted_iota(jnp.int32, (Lv, N_OUT), 0)
        f_idx = lax.broadcasted_iota(jnp.int32, (Lv, N_OUT), 1)
        limit = jnp.where(
            f_idx < F_PAD, L - FILTER_SIZES[0] + 1,
            jnp.where(f_idx < 2 * F_PAD, L - FILTER_SIZES[1] + 1,
                      L - FILTER_SIZES[2] + 1))
        val = jnp.where(t_idx < limit, val, 0.0)

        # --- global max-over-time pool, fully vectorized ---------------------
        pooled = jnp.max(val, axis=1)                        # [TB, N_OUT]

        # --- fused dense epilogue (Dropout(0.5) = inference identity) --------
        out_ref[...] = (jnp.dot(pooled, wd_ref[...],
                                preferred_element_type=jnp.float32)
                        + bd_ref[...])

    return kernel


@functools.partial(jax.jit, static_argnames=("numclasses", "block_b"))
def cnn_multichannel_forward(token_ids, embed1, embed2, params, *,
                             numclasses, block_b=32):
    """token_ids: int32 [B, maxlen]; embed1/embed2: [vocab, E] (two channels)."""
    assert block_b % 8 == 0
    B, L = token_ids.shape
    assert L >= max(FILTER_SIZES), "sequence shorter than largest filter"
    E = embed1.shape[1]
    C2 = 2 * E
    C2p = _round_up(C2, 128)                 # channel dim padded to full lanes
    C_pad = _round_up(numclasses, 128)       # logits padded to a full lane tile
    F = NUM_FILTERS
    w1, b1, w2, b2, w3, b3, wd, bd = params

    # ---- embeddings (two channels) + concat; gather stays in XLA glue ------
    # (gathered directly in bf16 to halve the glue slab's HBM traffic)
    x = jnp.concatenate(
        [jnp.take(embed1.astype(jnp.bfloat16), token_ids, axis=0),
         jnp.take(embed2.astype(jnp.bfloat16), token_ids, axis=0)],
        axis=-1)                                             # [B, L, 2E] bf16

    # ---- fused conv weights in im2col layout: [KMAX*C2p, 384] --------------
    def pad_w(w):   # [k, 2E, F] -> [KMAX, C2p, F_PAD]  (zero taps / channels / filters)
        k = w.shape[0]
        return jnp.pad(w, ((0, KMAX - k), (0, C2p - C2), (0, F_PAD - F)))

    def pad_b(b):   # [1, F] -> [1, F_PAD]
        return jnp.pad(b, ((0, 0), (0, F_PAD - F)))

    w_fused = jnp.concatenate([pad_w(w1), pad_w(w2), pad_w(w3)], axis=-1)
    w_fused = w_fused.reshape(KMAX * C2p, N_OUT).astype(jnp.bfloat16)
    b_fused = jnp.concatenate([pad_b(b1), pad_b(b2), pad_b(b3)], axis=-1)

    # dense weight rows re-laid-out to the padded 3*F_PAD feature layout
    wd_pad = jnp.concatenate(
        [jnp.pad(wd[j * F:(j + 1) * F, :], ((0, F_PAD - F), (0, 0)))
         for j in range(NUM_BRANCH)], axis=0)                # [384, C]
    wd_pad = jnp.pad(wd_pad, ((0, 0), (0, C_pad - numclasses)))  # [384, C_pad]
    bd_pad = jnp.pad(bd, ((0, 0), (0, C_pad - numclasses)))      # [1, C_pad]

    # ---- sublane-aligned time / batch padding ------------------------------
    Lv = _round_up(L - FILTER_SIZES[0] + 1, 8)    # pooled time positions (8-aligned)
    L_pad = _round_up(Lv + KMAX - 1, 16)          # per-sequence stride (bf16 tile)
    Bp8 = _round_up(B, 8)
    TB = min(block_b, Bp8)
    if Bp8 // TB < 2 and Bp8 >= 16:               # >= 2 grid steps (v7x: 2 TCs)
        TB = _round_up(Bp8 // 2, 8)
    Bp = _round_up(B, TB)

    x = jnp.pad(x, ((0, Bp - B), (0, L_pad - L), (0, C2p - C2)))  # [Bp, L_pad, C2p]

    kernel = _make_kernel(TB, Lv, L, C2p, C_pad)

    logits = pl.pallas_call(
        kernel,
        out_shape=jax.ShapeDtypeStruct((Bp, C_pad), jnp.float32),
        grid_spec=pltpu.PrefetchScalarGridSpec(
            num_scalar_prefetch=0,
            grid=(Bp // TB,),
            in_specs=[
                pl.BlockSpec((TB, L_pad, C2p), lambda i: (i, 0, 0)),
                pl.BlockSpec((KMAX * C2p, N_OUT), lambda i: (0, 0)),
                pl.BlockSpec((1, N_OUT), lambda i: (0, 0)),
                pl.BlockSpec((N_OUT, C_pad), lambda i: (0, 0)),
                pl.BlockSpec((1, C_pad), lambda i: (0, 0)),
            ],
            out_specs=pl.BlockSpec((TB, C_pad), lambda i: (i, 0)),
        ),
        compiler_params=pltpu.CompilerParams(
            dimension_semantics=("parallel",)),
    )(x, w_fused, b_fused, wd_pad, bd_pad)

    return logits[:B, :numclasses]


def _reference_forward(token_ids, embed1, embed2, params, numclasses):
    """Pure-JAX reference mirroring the PyTorch module (lax.conv, NCW)."""
    w1, b1, w2, b2, w3, b3, wd, bd = params
    x1 = jnp.take(embed1, token_ids, axis=0)
    x2 = jnp.take(embed2, token_ids, axis=0)
    x = jnp.concatenate([x1, x2], axis=-1)                  # [B, L, 2E]
    xn = jnp.transpose(x, (0, 2, 1))                        # [B, 2E, L] (NCW)
    feats = []
    for w, b in ((w1, b1), (w2, b2), (w3, b3)):
        w_torch = jnp.transpose(w, (2, 1, 0))               # [F, 2E, k] (OIW)
        conv = lax.conv_general_dilated(
            xn, w_torch, window_strides=(1,), padding="VALID",
            dimension_numbers=("NCH", "OIH", "NCH"))        # [B, F, L_out]
        conv = jnp.maximum(conv + b[0][None, :, None], 0.0)
        feats.append(jnp.max(conv, axis=-1))                # [B, F]
    feat = jnp.concatenate(feats, axis=1)                   # [B, 3F]
    return feat @ wd + bd                                   # [B, C]


def init_params(key, embeddim, numclasses):
    keys = jax.random.split(key, 8)
    F = NUM_FILTERS
    cin = 2 * embeddim
    scale = 0.05
    w1 = scale * jax.random.normal(keys[0], (FILTER_SIZES[0], cin, F), jnp.float32)
    w2 = scale * jax.random.normal(keys[1], (FILTER_SIZES[1], cin, F), jnp.float32)
    w3 = scale * jax.random.normal(keys[2], (FILTER_SIZES[2], cin, F), jnp.float32)
    b1 = scale * jax.random.normal(keys[3], (1, F), jnp.float32)
    b2 = scale * jax.random.normal(keys[4], (1, F), jnp.float32)
    b3 = scale * jax.random.normal(keys[5], (1, F), jnp.float32)
    wd = scale * jax.random.normal(keys[6], (3 * F, numclasses), jnp.float32)
    bd = scale * jax.random.normal(keys[7], (1, numclasses), jnp.float32)
    return (w1, b1, w2, b2, w3, b3, wd, bd)


if __name__ == "__main__":
    # Small shapes consistent with the module's forward.
    B, maxlen, vocab, embeddim, numclasses = 8, 16, 50, 32, 4

    key = jax.random.PRNGKey(0)
    k_e1, k_e2, k_par, k_tok = jax.random.split(key, 4)

    embed1 = jax.random.normal(k_e1, (vocab, embeddim), jnp.float32)  # trainable copy
    embed2 = jax.random.normal(k_e2, (vocab, embeddim), jnp.float32)  # frozen copy
    params = init_params(k_par, embeddim, numclasses)
    token_ids = jax.random.randint(k_tok, (B, maxlen), 0, vocab, dtype=jnp.int32)

    logits = cnn_multichannel_forward(token_ids, embed1, embed2, params,
                                      numclasses=numclasses)
    logits = jax.block_until_ready(logits)

    ref = _reference_forward(token_ids, embed1, embed2, params, numclasses)
    assert logits.shape == (B, numclasses)
    max_err = float(jnp.max(jnp.abs(logits - ref)))
    # bf16 conv inputs/weights vs f32 reference: tolerance is intentional.
    assert jnp.allclose(logits, ref, atol=3e-2, rtol=3e-2), (
        f"mismatch vs reference (max abs err {max_err})")

    print("KERNEL_OK")
</pallas_src>

<mosaic_0001>
module attributes {stable_mosaic.version = 11 : i64} {
  func.func @kernel(%arg0: i32, %arg1: memref<8x32x128xbf16, #tpu.memory_space<vmem>>, %arg2: memref<640x384xbf16, #tpu.memory_space<vmem>>, %arg3: memref<1x384xf32, #tpu.memory_space<vmem>>, %arg4: memref<384x128xf32, #tpu.memory_space<vmem>>, %arg5: memref<1x128xf32, #tpu.memory_space<vmem>>, %arg6: memref<8x128xf32, #tpu.memory_space<vmem>>) attributes {dimension_semantics = [#tpu.dimension_semantics<parallel>], iteration_bounds = array<i64: 1>, scalar_prefetch = 0 : i64, scratch_operands = 0 : i64, tpu.core_type = #tpu.core_type<tc>, window_params = [{transform_indices = @transform_0, window_bounds = array<i64: 8, 32, 128>}, {pipeline_mode = #tpu.pipeline_mode<synchronous>, transform_indices = @transform_1, window_bounds = array<i64: 640, 384>}, {pipeline_mode = #tpu.pipeline_mode<synchronous>, transform_indices = @transform_2, window_bounds = array<i64: 1, 384>}, {pipeline_mode = #tpu.pipeline_mode<synchronous>, transform_indices = @transform_3, window_bounds = array<i64: 384, 128>}, {pipeline_mode = #tpu.pipeline_mode<synchronous>, transform_indices = @transform_4, window_bounds = array<i64: 1, 128>}, {transform_indices = @transform_5, window_bounds = array<i64: 8, 128>}]} {
    %c0 = arith.constant 0 : index
    %c0_0 = arith.constant 0 : index
    %c0_1 = arith.constant 0 : index
    %0 = vector.load %arg1[%c0, %c0_0, %c0_1] : memref<8x32x128xbf16, #tpu.memory_space<vmem>>, vector<8x16x128xbf16>
    %c0_2 = arith.constant 0 : index
    %c1 = arith.constant 1 : index
    %c0_3 = arith.constant 0 : index
    %1 = vector.load %arg1[%c0_2, %c1, %c0_3] : memref<8x32x128xbf16, #tpu.memory_space<vmem>>, vector<8x16x128xbf16>
    %c0_4 = arith.constant 0 : index
    %c2 = arith.constant 2 : index
    %c0_5 = arith.constant 0 : index
    %2 = vector.load %arg1[%c0_4, %c2, %c0_5] : memref<8x32x128xbf16, #tpu.memory_space<vmem>>, vector<8x16x128xbf16>
    %c0_6 = arith.constant 0 : index
    %c3 = arith.constant 3 : index
    %c0_7 = arith.constant 0 : index
    %3 = vector.load %arg1[%c0_6, %c3, %c0_7] : memref<8x32x128xbf16, #tpu.memory_space<vmem>>, vector<8x16x128xbf16>
    %c0_8 = arith.constant 0 : index
    %c4 = arith.constant 4 : index
    %c0_9 = arith.constant 0 : index
    %4 = vector.load %arg1[%c0_8, %c4, %c0_9] : memref<8x32x128xbf16, #tpu.memory_space<vmem>>, vector<8x16x128xbf16>
    %5 = tpu.concatenate %0, %1, %2, %3, %4 in 2 : vector<8x16x128xbf16>, vector<8x16x128xbf16>, vector<8x16x128xbf16>, vector<8x16x128xbf16>, vector<8x16x128xbf16> -> vector<8x16x640xbf16>
    %6 = vector.shape_cast %5 : vector<8x16x640xbf16> to vector<128x640xbf16>
    %c0_10 = arith.constant 0 : index
    %c0_11 = arith.constant 0 : index
    %7 = vector.load %arg2[%c0_10, %c0_11] : memref<640x384xbf16, #tpu.memory_space<vmem>>, vector<640x384xbf16>
    %cst = arith.constant dense<0.000000e+00> : vector<128x384xf32>
    %8 = tpu.matmul %6, %7, %cst {dimension_numbers = #tpu.dot_dimension_numbers<[1], [0], [0], [1], [0, 0, 1, 1], [], []>} : vector<128x640xbf16>, vector<640x384xbf16>, vector<128x384xf32> -> vector<128x384xf32>
    %c0_12 = arith.constant 0 : index
    %c0_13 = arith.constant 0 : index
    %9 = vector.load %arg3[%c0_12, %c0_13] : memref<1x384xf32, #tpu.memory_space<vmem>>, vector<1x384xf32>
    %10 = vector.broadcast %9 : vector<1x384xf32> to vector<128x384xf32>
    %11 = arith.addf %8, %10 : vector<128x384xf32>
    %cst_14 = arith.constant 0.000000e+00 : f32
    %12 = vector.broadcast %cst_14 : f32 to vector<128x384xf32>
    %13 = arith.maximumf %11, %12 : vector<128x384xf32>
    %14 = vector.shape_cast %13 : vector<128x384xf32> to vector<8x16x384xf32>
    %15 = tpu.iota {dimensions = array<i32: 0>} : vector<16x384xi32>
    %16 = tpu.iota {dimensions = array<i32: 1>} : vector<16x384xi32>
    %c128_i32 = arith.constant 128 : i32
    %17 = vector.broadcast %c128_i32 : i32 to vector<16x384xi32>
    %18 = arith.cmpi slt, %16, %17 : vector<16x384xi32>
    %c256_i32 = arith.constant 256 : i32
    %19 = vector.broadcast %c256_i32 : i32 to vector<16x384xi32>
    %20 = arith.cmpi slt, %16, %19 : vector<16x384xi32>
    %c13_i32 = arith.constant 13 : i32
    %c12_i32 = arith.constant 12 : i32
    %21 = vector.broadcast %c13_i32 : i32 to vector<16x384xi32>
    %22 = vector.broadcast %c12_i32 : i32 to vector<16x384xi32>
    %23 = arith.select %20, %21, %22 : vector<16x384xi1>, vector<16x384xi32>
    %c14_i32 = arith.constant 14 : i32
    %24 = vector.broadcast %c14_i32 : i32 to vector<16x384xi32>
    %25 = arith.select %18, %24, %23 : vector<16x384xi1>, vector<16x384xi32>
    %26 = arith.cmpi slt, %15, %25 : vector<16x384xi32>
    %cst_15 = arith.constant 0.000000e+00 : f32
    %27 = vector.shape_cast %26 : vector<16x384xi1> to vector<1x16x384xi1>
    %28 = vector.broadcast %27 : vector<1x16x384xi1> to vector<8x16x384xi1>
    %29 = vector.broadcast %cst_15 : f32 to vector<8x16x384xf32>
    %30 = arith.select %28, %14, %29 : vector<8x16x384xi1>, vector<8x16x384xf32>
    %cst_16 = arith.constant dense<0xFF800000> : vector<8x384xf32>
    %31 = vector.multi_reduction <maximumf>, %30, %cst_16 [1] : vector<8x16x384xf32> to vector<8x384xf32>
    %c0_17 = arith.constant 0 : index
    %c0_18 = arith.constant 0 : index
    %32 = vector.load %arg4[%c0_17, %c0_18] : memref<384x128xf32, #tpu.memory_space<vmem>>, vector<384x128xf32>
    %cst_19 = arith.constant dense<0.000000e+00> : vector<8x128xf32>
    %33 = tpu.matmul %31, %32, %cst_19 {dimension_numbers = #tpu.dot_dimension_numbers<[1], [0], [0], [1], [0, 0, 1, 1], [], []>} : vector<8x384xf32>, vector<384x128xf32>, vector<8x128xf32> -> vector<8x128xf32>
    %c0_20 = arith.constant 0 : index
    %c0_21 = arith.constant 0 : index
    %34 = vector.load %arg5[%c0_20, %c0_21] : memref<1x128xf32, #tpu.memory_space<vmem>>, vector<1x128xf32>
    %35 = vector.broadcast %34 : vector<1x128xf32> to vector<8x128xf32>
    %36 = arith.addf %33, %35 : vector<8x128xf32>
    %c0_22 = arith.constant 0 : index
    %c0_23 = arith.constant 0 : index
    %37 = vector.load %arg6[%c0_22, %c0_23] : memref<8x128xf32, #tpu.memory_space<vmem>>, vector<8x128xf32>
    tpu.vector_store %arg6[%c0_22, %c0_23], %36 {strides = array<i32>} : memref<8x128xf32, #tpu.memory_space<vmem>>, vector<8x128xf32>,
    return
  }
  func.func @transform_0(%arg0: i32) -> (i32, i32, i32) {
    %c0_i32 = arith.constant 0 : i32
    %c0_i32_0 = arith.constant 0 : i32
    %c0_i32_1 = arith.constant 0 : i32
    return %arg0, %c0_i32, %c0_i32_0 : i32, i32, i32
  }
  func.func @transform_1(%arg0: i32) -> (i32, i32) {
    %c0_i32 = arith.constant 0 : i32
    %c0_i32_0 = arith.constant 0 : i32
    %c0_i32_1 = arith.constant 0 : i32
    return %c0_i32, %c0_i32_0 : i32, i32
  }
  func.func @transform_2(%arg0: i32) -> (i32, i32) {
    %c0_i32 = arith.constant 0 : i32
    %c0_i32_0 = arith.constant 0 : i32
    %c0_i32_1 = arith.constant 0 : i32
    return %c0_i32, %c0_i32_0 : i32, i32
  }
  func.func @transform_3(%arg0: i32) -> (i32, i32) {
    %c0_i32 = arith.constant 0 : i32
    %c0_i32_0 = arith.constant 0 : i32
    %c0_i32_1 = arith.constant 0 : i32
    return %c0_i32, %c0_i32_0 : i32, i32
  }
  func.func @transform_4(%arg0: i32) -> (i32, i32) {
    %c0_i32 = arith.constant 0 : i32
    %c0_i32_0 = arith.constant 0 : i32
    %c0_i32_1 = arith.constant 0 : i32
    return %c0_i32, %c0_i32_0 : i32, i32
  }
  func.func @transform_5(%arg0: i32) -> (i32, i32) {
    %c0_i32 = arith.constant 0 : i32
    %c0_i32_0 = arith.constant 0 : i32
    return %arg0, %c0_i32 : i32, i32
  }
}

</mosaic_0001>

<llo_original>
// kernel: cnn_multichannel_forward.1
$region0: #{cnn_multichannel_forward.1}
  #allocation0 [shape = 'u32[]', space=smem, size = 0x4, offset = 0x4, fixed_abs, tag = 'smem constant byte address 0x4 - core index']
  #allocation1 [shape = 'u32[144,128]{1,0:T(1,128)}', space=vmem, size = 0x12000, scoped, tag = 'internal scratch']
  %s0 = inlined_call_operand.vmem [shape: bf16[8,32,128], index: 0, kind: input, shape index: {}]
  %s1 = inlined_call_operand.vmem [shape: bf16[640,384], index: 1, kind: input, shape index: {}]
  %s2 = inlined_call_operand.vmem [shape: f32[1,384], index: 2, kind: input, shape index: {}]
  %s3 = inlined_call_operand.vmem [shape: f32[384,128], index: 3, kind: input, shape index: {}]
  %s4 = inlined_call_operand.vmem [shape: f32[1,128], index: 4, kind: input, shape index: {}]
  %s5 = inlined_call_operand.vmem [shape: f32[8,128], index: 5, kind: output, shape index: {}]
  %s6 = sld [smem:[#allocation0]]
  $region30: #{cnn_multichannel_forward.1} parent=0
    _
  %s8 = ssub.s32 1, %s6
  %s9 = scalar_select 0, %s8, %s6
  // Predicated region
  $region2: #{cnn_multichannel_forward.1} parent=0 // pred_check
    _
  $region3: #{cnn_multichannel_forward.1} parent=0 // pred_check_branch
    %11 = sbr.rel (0) target = $region5
  $region4: #{cnn_multichannel_forward.1} parent=0 // pred_region
    _
  $region5: #{cnn_multichannel_forward.1} parent=0 // pred_fallthru
    _
  // Predicated region
  $region6: #{cnn_multichannel_forward.1} parent=0 // pred_check
    _
  $region7: #{cnn_multichannel_forward.1} parent=0 // pred_check_branch
    %13 = sbr.rel (0) target = $region9
  $region8: #{cnn_multichannel_forward.1} parent=0 // pred_region
    _
  $region9: #{cnn_multichannel_forward.1} parent=0 // pred_fallthru
    _
  // Predicated region
  $region10: #{cnn_multichannel_forward.1} parent=0 // pred_check
    _
  $region11: #{cnn_multichannel_forward.1} parent=0 // pred_check_branch
    %15 = sbr.rel (0) target = $region13
  $region12: #{cnn_multichannel_forward.1} parent=0 // pred_region
    _
  $region13: #{cnn_multichannel_forward.1} parent=0 // pred_fallthru
    _
  // Predicated region
  $region14: #{cnn_multichannel_forward.1} parent=0 // pred_check
    _
  $region15: #{cnn_multichannel_forward.1} parent=0 // pred_check_branch
    %17 = sbr.rel (0) target = $region17
  $region16: #{cnn_multichannel_forward.1} parent=0 // pred_region
    _
  $region17: #{cnn_multichannel_forward.1} parent=0 // pred_fallthru
    _
  // Predicated region
  $region18: #{cnn_multichannel_forward.1} parent=0 // pred_check
    _
  $region19: #{cnn_multichannel_forward.1} parent=0 // pred_check_branch
    %19 = sbr.rel (0) target = $region21
  $region20: #{cnn_multichannel_forward.1} parent=0 // pred_region
    _
  $region21: #{cnn_multichannel_forward.1} parent=0 // pred_fallthru
    _
  %v21 = vld [vmem:[%s0] sm:$0xf]
  %v22 = vld [vmem:[%s0 + $0x4] sm:$0xf]
  %v23 = vld [vmem:[%s0 + $0x10] sm:$0xf]
  %v24 = vld [vmem:[%s0 + $0x14] sm:$0xf]
  %v25 = vld [vmem:[%s0 + $0x20] sm:$0xf]
  %v26 = vld [vmem:[%s0 + $0x24] sm:$0xf]
  %v27 = vld [vmem:[%s0 + $0x30] sm:$0xf]
  %v28 = vld [vmem:[%s0 + $0x34] sm:$0xf]
  %v29 = vld [vmem:[%s0 + $0x40] sm:$0xf]
  %v30 = vld [vmem:[%s0 + $0x44] sm:$0xf]
  %v31 = vld [vmem:[%s0 + $0x50] sm:$0xf]
  %v32 = vld [vmem:[%s0 + $0x54] sm:$0xf]
  %v33 = vld [vmem:[%s0 + $0x60] sm:$0xf]
  %v34 = vld [vmem:[%s0 + $0x64] sm:$0xf]
  %v35 = vld [vmem:[%s0 + $0x70] sm:$0xf]
  %v36 = vld [vmem:[%s0 + $0x74] sm:$0xf]
  %v37 = vld [vmem:[%s0 + $0x8] sm:$0x1]
  %v38 = vld [vmem:[%s0 + $0x18] sm:$0x1]
  %v39 = vld [vmem:[%s0 + $0x28] sm:$0x1]
  %v40 = vld [vmem:[%s0 + $0x38] sm:$0x1]
  %v41 = vld [vmem:[%s0 + $0x48] sm:$0x1]
  %v42 = vld [vmem:[%s0 + $0x58] sm:$0x1]
  %v43 = vld [vmem:[%s0 + $0x68] sm:$0x1]
  %v44 = vld [vmem:[%s0 + $0x78] sm:$0x1]
  %v45 = vld [vmem:[%s0] sm:$0xe]
  %v46 = vld [vmem:[%s0 + $0x10] sm:$0xe]
  %v47 = vld [vmem:[%s0 + $0x20] sm:$0xe]
  %v48 = vld [vmem:[%s0 + $0x30] sm:$0xe]
  %v49 = vld [vmem:[%s0 + $0x40] sm:$0xe]
  %v50 = vld [vmem:[%s0 + $0x50] sm:$0xe]
  %v51 = vld [vmem:[%s0 + $0x60] sm:$0xe]
  %v52 = vld [vmem:[%s0 + $0x70] sm:$0xe]
  %v53 = vld [vmem:[%s0 + $0x8] sm:$0x3]
  %v54 = vld [vmem:[%s0 + $0x18] sm:$0x3]
  %v55 = vld [vmem:[%s0 + $0x28] sm:$0x3]
  %v56 = vld [vmem:[%s0 + $0x38] sm:$0x3]
  %v57 = vld [vmem:[%s0 + $0x48] sm:$0x3]
  %v58 = vld [vmem:[%s0 + $0x58] sm:$0x3]
  %v59 = vld [vmem:[%s0 + $0x68] sm:$0x3]
  %v60 = vld [vmem:[%s0 + $0x78] sm:$0x3]
  %v61 = vld [vmem:[%s0] sm:$0xc]
  %v62 = vld [vmem:[%s0 + $0x10] sm:$0xc]
  %v63 = vld [vmem:[%s0 + $0x20] sm:$0xc]
  %v64 = vld [vmem:[%s0 + $0x30] sm:$0xc]
  %v65 = vld [vmem:[%s0 + $0x40] sm:$0xc]
  %v66 = vld [vmem:[%s0 + $0x50] sm:$0xc]
  %v67 = vld [vmem:[%s0 + $0x60] sm:$0xc]
  %v68 = vld [vmem:[%s0 + $0x70] sm:$0xc]
  %v85 = vunpack.c.l.b16 %v21
  %v86 = vunpack.c.l.b16 %v22
  %v87 = vunpack.c.l.b16 %v23
  %v88 = vunpack.c.l.b16 %v24
  %v89 = vunpack.c.l.b16 %v25
  %v90 = vunpack.c.l.b16 %v26
  %v91 = vunpack.c.l.b16 %v27
  %v92 = vunpack.c.l.b16 %v28
  %v93 = vunpack.c.l.b16 %v29
  %v94 = vunpack.c.l.b16 %v30
  %v95 = vunpack.c.l.b16 %v31
  %v96 = vunpack.c.l.b16 %v32
  %v97 = vunpack.c.l.b16 %v33
  %v98 = vunpack.c.l.b16 %v34
  %v99 = vunpack.c.l.b16 %v35
  %v100 = vunpack.c.l.b16 %v36
  %v101 = vpack.c.b16 %v86, %v85
  %v102 = vpack.c.b16 %v88, %v87
  %v103 = vpack.c.b16 %v90, %v89
  %v104 = vpack.c.b16 %v92, %v91
  %v105 = vpack.c.b16 %v94, %v93
  %v106 = vpack.c.b16 %v96, %v95
  %v107 = vpack.c.b16 %v98, %v97
  %v108 = vpack.c.b16 %v100, %v99
  %v125 = vunpack.c.l.b16 %v37
  %v126 = vunpack.c.l.b16 %v38
  %v127 = vunpack.c.l.b16 %v39
  %v128 = vunpack.c.l.b16 %v40
  %v129 = vunpack.c.l.b16 %v41
  %v130 = vunpack.c.l.b16 %v42
  %v131 = vunpack.c.l.b16 %v43
  %v132 = vunpack.c.l.b16 %v44
  %v133 = vpack.c.b16 %v125, %v125
  %v134 = vpack.c.b16 %v126, %v126
  %v135 = vpack.c.b16 %v127, %v127
  %v136 = vpack.c.b16 %v128, %v128
  %v137 = vpack.c.b16 %v129, %v129
  %v138 = vpack.c.b16 %v130, %v130
  %v139 = vpack.c.b16 %v131, %v131
  %v140 = vpack.c.b16 %v132, %v132
  %vm141 = vsmask.f32 7424
  %v143 = vshrl.u32 %v101, 16
  %v145 = vshll.u32 %v101, 16
  %v147 = vrot.slane %v145, 1
  %v148 = vor.u32 %v143, %v147
  %v150 = vshll.u32 %v133, 16
  %v152 = vrot.slane %v150, 1
  %v153 = vsel %vm141, %v148, %v152
  %v155 = vshrl.u32 %v102, 16
  %v157 = vshll.u32 %v102, 16
  %v159 = vrot.slane %v157, 1
  %v160 = vor.u32 %v155, %v159
  %v162 = vshll.u32 %v134, 16
  %v164 = vrot.slane %v162, 1
  %v165 = vsel %vm141, %v160, %v164
  %v167 = vshrl.u32 %v103, 16
  %v169 = vshll.u32 %v103, 16
  %v171 = vrot.slane %v169, 1
  %v172 = vor.u32 %v167, %v171
  %v174 = vshll.u32 %v135, 16
  %v176 = vrot.slane %v174, 1
  %v177 = vsel %vm141, %v172, %v176
  %v179 = vshrl.u32 %v104, 16
  %v181 = vshll.u32 %v104, 16
  %v183 = vrot.slane %v181, 1
  %v184 = vor.u32 %v179, %v183
  %v186 = vshll.u32 %v136, 16
  %v188 = vrot.slane %v186, 1
  %v189 = vsel %vm141, %v184, %v188
  %v191 = vshrl.u32 %v105, 16
  %v193 = vshll.u32 %v105, 16
  %v195 = vrot.slane %v193, 1
  %v196 = vor.u32 %v191, %v195
  %v198 = vshll.u32 %v137, 16
  %v200 = vrot.slane %v198, 1
  %v201 = vsel %vm141, %v196, %v200
  %v203 = vshrl.u32 %v106, 16
  %v205 = vshll.u32 %v106, 16
  %v207 = vrot.slane %v205, 1
  %v208 = vor.u32 %v203, %v207
  %v210 = vshll.u32 %v138, 16
  %v212 = vrot.slane %v210, 1
  %v213 = vsel %vm141, %v208, %v212
  %v215 = vshrl.u32 %v107, 16
  %v217 = vshll.u32 %v107, 16
  %v219 = vrot.slane %v217, 1
  %v220 = vor.u32 %v215, %v219
  %v222 = vshll.u32 %v139, 16
  %v224 = vrot.slane %v222, 1
  %v225 = vsel %vm141, %v220, %v224
  %v227 = vshrl.u32 %v108, 16
  %v229 = vshll.u32 %v108, 16
  %v231 = vrot.slane %v229, 1
  %v232 = vor.u32 %v227, %v231
  %v234 = vshll.u32 %v140, 16
  %v236 = vrot.slane %v234, 1
  %v237 = vsel %vm141, %v232, %v236
  %v254 = vunpack.c.l.b16 %v45
  %v255 = vunpack.c.l.b16 %v46
  %v256 = vunpack.c.l.b16 %v47
  %v257 = vunpack.c.l.b16 %v48
  %v258 = vunpack.c.l.b16 %v49
  %v259 = vunpack.c.l.b16 %v50
  %v260 = vunpack.c.l.b16 %v51
  %v261 = vunpack.c.l.b16 %v52
  %v262 = vpack.c.b16 %v86, %v254
  %v263 = vpack.c.b16 %v88, %v255
  %v264 = vpack.c.b16 %v90, %v256
  %v265 = vpack.c.b16 %v92, %v257
  %v266 = vpack.c.b16 %v94, %v258
  %v267 = vpack.c.b16 %v96, %v259
  %v268 = vpack.c.b16 %v98, %v260
  %v269 = vpack.c.b16 %v100, %v261
  %vm270 = vcmask 1046528
  %v271 = vrot.slane %v262, 1
  %v272 = vrot.slane %v133, 1
  %v273 = vsel %vm270, %v271, %v272
  %v274 = vrot.slane %v263, 1
  %v275 = vrot.slane %v134, 1
  %v276 = vsel %vm270, %v274, %v275
  %v277 = vrot.slane %v264, 1
  %v278 = vrot.slane %v135, 1
  %v279 = vsel %vm270, %v277, %v278
  %v280 = vrot.slane %v265, 1
  %v281 = vrot.slane %v136, 1
  %v282 = vsel %vm270, %v280, %v281
  %v283 = vrot.slane %v266, 1
  %v284 = vrot.slane %v137, 1
  %v285 = vsel %vm270, %v283, %v284
  %v286 = vrot.slane %v267, 1
  %v287 = vrot.slane %v138, 1
  %v288 = vsel %vm270, %v286, %v287
  %v289 = vrot.slane %v268, 1
  %v290 = vrot.slane %v139, 1
  %v291 = vsel %vm270, %v289, %v290
  %v292 = vrot.slane %v269, 1
  %v293 = vrot.slane %v140, 1
  %v294 = vsel %vm270, %v292, %v293
  %v311 = vunpack.c.l.b16 %v53
  %v312 = vunpack.c.l.b16 %v54
  %v313 = vunpack.c.l.b16 %v55
  %v314 = vunpack.c.l.b16 %v56
  %v315 = vunpack.c.l.b16 %v57
  %v316 = vunpack.c.l.b16 %v58
  %v317 = vunpack.c.l.b16 %v59
  %v318 = vunpack.c.l.b16 %v60
  %v319 = vpack.c.b16 %v311, %v311
  %v320 = vpack.c.b16 %v312, %v312
  %v321 = vpack.c.b16 %v313, %v313
  %v322 = vpack.c.b16 %v314, %v314
  %v323 = vpack.c.b16 %v315, %v315
  %v324 = vpack.c.b16 %v316, %v316
  %v325 = vpack.c.b16 %v317, %v317
  %v326 = vpack.c.b16 %v318, %v318
  %vm327 = vsmask.f32 6400
  %v329 = vshrl.u32 %v262, 16
  %v331 = vrot.slane %v329, 1
  %v332 = vshll.u32 %v262, 16
  %v334 = vrot.slane %v332, 2
  %v335 = vor.u32 %v331, %v334
  %v337 = vshrl.u32 %v319, 16
  %v339 = vrot.slane %v337, 1
  %v340 = vshll.u32 %v319, 16
  %v342 = vrot.slane %v340, 2
  %v343 = vor.u32 %v339, %v342
  %v344 = vsel %vm327, %v335, %v343
  %v346 = vshrl.u32 %v263, 16
  %v348 = vrot.slane %v346, 1
  %v349 = vshll.u32 %v263, 16
  %v351 = vrot.slane %v349, 2
  %v352 = vor.u32 %v348, %v351
  %v354 = vshrl.u32 %v320, 16
  %v356 = vrot.slane %v354, 1
  %v357 = vshll.u32 %v320, 16
  %v359 = vrot.slane %v357, 2
  %v360 = vor.u32 %v356, %v359
  %v361 = vsel %vm327, %v352, %v360
  %v363 = vshrl.u32 %v264, 16
  %v365 = vrot.slane %v363, 1
  %v366 = vshll.u32 %v264, 16
  %v368 = vrot.slane %v366, 2
  %v369 = vor.u32 %v365, %v368
  %v371 = vshrl.u32 %v321, 16
  %v373 = vrot.slane %v371, 1
  %v374 = vshll.u32 %v321, 16
  %v376 = vrot.slane %v374, 2
  %v377 = vor.u32 %v373, %v376
  %v378 = vsel %vm327, %v369, %v377
  %v380 = vshrl.u32 %v265, 16
  %v382 = vrot.slane %v380, 1
  %v383 = vshll.u32 %v265, 16
  %v385 = vrot.slane %v383, 2
  %v386 = vor.u32 %v382, %v385
  %v388 = vshrl.u32 %v322, 16
  %v390 = vrot.slane %v388, 1
  %v391 = vshll.u32 %v322, 16
  %v393 = vrot.slane %v391, 2
  %v394 = vor.u32 %v390, %v393
  %v395 = vsel %vm327, %v386, %v394
  %v397 = vshrl.u32 %v266, 16
  %v399 = vrot.slane %v397, 1
  %v400 = vshll.u32 %v266, 16
  %v402 = vrot.slane %v400, 2
  %v403 = vor.u32 %v399, %v402
  %v405 = vshrl.u32 %v323, 16
  %v407 = vrot.slane %v405, 1
  %v408 = vshll.u32 %v323, 16
  %v410 = vrot.slane %v408, 2
  %v411 = vor.u32 %v407, %v410
  %v412 = vsel %vm327, %v403, %v411
  %v414 = vshrl.u32 %v267, 16
  %v416 = vrot.slane %v414, 1
  %v417 = vshll.u32 %v267, 16
  %v419 = vrot.slane %v417, 2
  %v420 = vor.u32 %v416, %v419
  %v422 = vshrl.u32 %v324, 16
  %v424 = vrot.slane %v422, 1
  %v425 = vshll.u32 %v324, 16
  %v427 = vrot.slane %v425, 2
  %v428 = vor.u32 %v424, %v427
  %v429 = vsel %vm327, %v420, %v428
  %v431 = vshrl.u32 %v268, 16
  %v433 = vrot.slane %v431, 1
  %v434 = vshll.u32 %v268, 16
  %v436 = vrot.slane %v434, 2
  %v437 = vor.u32 %v433, %v436
  %v439 = vshrl.u32 %v325, 16
  %v441 = vrot.slane %v439, 1
  %v442 = vshll.u32 %v325, 16
  %v444 = vrot.slane %v442, 2
  %v445 = vor.u32 %v441, %v444
  %v446 = vsel %vm327, %v437, %v445
  %v448 = vshrl.u32 %v269, 16
  %v450 = vrot.slane %v448, 1
  %v451 = vshll.u32 %v269, 16
  %v453 = vrot.slane %v451, 2
  %v454 = vor.u32 %v450, %v453
  %v456 = vshrl.u32 %v326, 16
  %v458 = vrot.slane %v456, 1
  %v459 = vshll.u32 %v326, 16
  %v461 = vrot.slane %v459, 2
  %v462 = vor.u32 %v458, %v461
  %v463 = vsel %vm327, %v454, %v462
  %v480 = vunpack.c.l.b16 %v61
  %v481 = vunpack.c.l.b16 %v62
  %v482 = vunpack.c.l.b16 %v63
  %v483 = vunpack.c.l.b16 %v64
  %v484 = vunpack.c.l.b16 %v65
  %v485 = vunpack.c.l.b16 %v66
  %v486 = vunpack.c.l.b16 %v67
  %v487 = vunpack.c.l.b16 %v68
  %v488 = vpack.c.b16 %v86, %v480
  %v489 = vpack.c.b16 %v88, %v481
  %v490 = vpack.c.b16 %v90, %v482
  %v491 = vpack.c.b16 %v92, %v483
  %v492 = vpack.c.b16 %v94, %v484
  %v493 = vpack.c.b16 %v96, %v485
  %v494 = vpack.c.b16 %v98, %v486
  %v495 = vpack.c.b16 %v100, %v487
  %vm496 = vcmask 1045504
  %v497 = vrot.slane %v488, 2
  %v498 = vrot.slane %v319, 2
  %v499 = vsel %vm496, %v497, %v498
  %v500 = vrot.slane %v489, 2
  %v501 = vrot.slane %v320, 2
  %v502 = vsel %vm496, %v500, %v501
  %v503 = vrot.slane %v490, 2
  %v504 = vrot.slane %v321, 2
  %v505 = vsel %vm496, %v503, %v504
  %v506 = vrot.slane %v491, 2
  %v507 = vrot.slane %v322, 2
  %v508 = vsel %vm496, %v506, %v507
  %v509 = vrot.slane %v492, 2
  %v510 = vrot.slane %v323, 2
  %v511 = vsel %vm496, %v509, %v510
  %v512 = vrot.slane %v493, 2
  %v513 = vrot.slane %v324, 2
  %v514 = vsel %vm496, %v512, %v513
  %v515 = vrot.slane %v494, 2
  %v516 = vrot.slane %v325, 2
  %v517 = vsel %vm496, %v515, %v516
  %v518 = vrot.slane %v495, 2
  %v519 = vrot.slane %v326, 2
  %v520 = vsel %vm496, %v518, %v519
  %v529 = vld [vmem:[%s1] sm:$0xff]
  %v530 = vld [vmem:[%s1 + $0x8] sm:$0xf]
  %v531 = vld [vmem:[%s1 + $0xc] sm:$0xff]
  %v532 = vld [vmem:[%s1 + $0x14] sm:$0xf]
  %v533 = vld [vmem:[%s1 + $0x18] sm:$0xff]
  %v534 = vld [vmem:[%s1 + $0x20] sm:$0xf]
  %v535 = vld [vmem:[%s1 + $0x24] sm:$0xff]
  %v536 = vld [vmem:[%s1 + $0x2c] sm:$0xf]
  %v537 = vld [vmem:[%s1 + $0x30] sm:$0xff]
  %v538 = vld [vmem:[%s1 + $0x38] sm:$0xf]
  %v539 = vld [vmem:[%s1 + $0x3c] sm:$0xff]
  %v540 = vld [vmem:[%s1 + $0x44] sm:$0xf]
  %v541 = vld [vmem:[%s1 + $0x48] sm:$0xff]
  %v542 = vld [vmem:[%s1 + $0x50] sm:$0xf]
  %v543 = vld [vmem:[%s1 + $0x54] sm:$0xff]
  %v544 = vld [vmem:[%s1 + $0x5c] sm:$0xf]
  %v545 = vld [vmem:[%s1 + $0x60] sm:$0xff]
  %v546 = vld [vmem:[%s1 + $0x68] sm:$0xf]
  %v547 = vld [vmem:[%s1 + $0x6c] sm:$0xff]
  %v548 = vld [vmem:[%s1 + $0x74] sm:$0xf]
  %v549 = vld [vmem:[%s1 + $0x78] sm:$0xff]
  %v550 = vld [vmem:[%s1 + $0x80] sm:$0xf]
  %v551 = vld [vmem:[%s1 + $0x84] sm:$0xff]
  %v552 = vld [vmem:[%s1 + $0x8c] sm:$0xf]
  %v553 = vld [vmem:[%s1 + $0x90] sm:$0xff]
  %v554 = vld [vmem:[%s1 + $0x98] sm:$0xf]
  %v555 = vld [vmem:[%s1 + $0x9c] sm:$0xff]
  %v556 = vld [vmem:[%s1 + $0xa4] sm:$0xf]
  %v557 = vld [vmem:[%s1 + $0xa8] sm:$0xff]
  %v558 = vld [vmem:[%s1 + $0xb0] sm:$0xf]
  %v559 = vld [vmem:[%s1 + $0xb4] sm:$0xff]
  %v560 = vld [vmem:[%s1 + $0xbc] sm:$0xf]
  %v561 = vld [vmem:[%s1 + $0xc0] sm:$0xff]
  %v562 = vld [vmem:[%s1 + $0xc8] sm:$0xf]
  %v563 = vld [vmem:[%s1 + $0xcc] sm:$0xff]
  %v564 = vld [vmem:[%s1 + $0xd4] sm:$0xf]
  %v565 = vld [vmem:[%s1 + $0xd8] sm:$0xff]
  %v566 = vld [vmem:[%s1 + $0xe0] sm:$0xf]
  %v567 = vld [vmem:[%s1 + $0xe4] sm:$0xff]
  %v568 = vld [vmem:[%s1 + $0xec] sm:$0xf]
  %v569 = vld [vmem:[%s1 + $0xf0] sm:$0xff]
  %v570 = vld [vmem:[%s1 + $0xf8] sm:$0xf]
  %v571 = vld [vmem:[%s1 + $0xfc] sm:$0xff]
  %v572 = vld [vmem:[%s1 + $0x104] sm:$0xf]
  %v573 = vld [vmem:[%s1 + $0x108] sm:$0xff]
  %v574 = vld [vmem:[%s1 + $0x110] sm:$0xf]
  %v575 = vld [vmem:[%s1 + $0x114] sm:$0xff]
  %v576 = vld [vmem:[%s1 + $0x11c] sm:$0xf]
  %v577 = vld [vmem:[%s1 + $0x120] sm:$0xff]
  %v578 = vld [vmem:[%s1 + $0x128] sm:$0xf]
  %v579 = vld [vmem:[%s1 + $0x12c] sm:$0xff]
  %v580 = vld [vmem:[%s1 + $0x134] sm:$0xf]
  %v581 = vld [vmem:[%s1 + $0x138] sm:$0xff]
  %v582 = vld [vmem:[%s1 + $0x140] sm:$0xf]
  %v583 = vld [vmem:[%s1 + $0x144] sm:$0xff]
  %v584 = vld [vmem:[%s1 + $0x14c] sm:$0xf]
  %v585 = vld [vmem:[%s1 + $0x150] sm:$0xff]
  %v586 = vld [vmem:[%s1 + $0x158] sm:$0xf]
  %v587 = vld [vmem:[%s1 + $0x15c] sm:$0xff]
  %v588 = vld [vmem:[%s1 + $0x164] sm:$0xf]
  %v589 = vld [vmem:[%s1 + $0x168] sm:$0xff]
  %v590 = vld [vmem:[%s1 + $0x170] sm:$0xf]
  %v591 = vld [vmem:[%s1 + $0x174] sm:$0xff]
  %v592 = vld [vmem:[%s1 + $0x17c] sm:$0xf]
  %v593 = vld [vmem:[%s1 + $0x180] sm:$0xff]
  %v594 = vld [vmem:[%s1 + $0x188] sm:$0xf]
  %v595 = vld [vmem:[%s1 + $0x18c] sm:$0xff]
  %v596 = vld [vmem:[%s1 + $0x194] sm:$0xf]
  %v597 = vld [vmem:[%s1 + $0x198] sm:$0xff]
  %v598 = vld [vmem:[%s1 + $0x1a0] sm:$0xf]
  %v599 = vld [vmem:[%s1 + $0x1a4] sm:$0xff]
  %v600 = vld [vmem:[%s1 + $0x1ac] sm:$0xf]
  %v601 = vld [vmem:[%s1 + $0x1b0] sm:$0xff]
  %v602 = vld [vmem:[%s1 + $0x1b8] sm:$0xf]
  %v603 = vld [vmem:[%s1 + $0x1bc] sm:$0xff]
  %v604 = vld [vmem:[%s1 + $0x1c4] sm:$0xf]
  %v605 = vld [vmem:[%s1 + $0x1c8] sm:$0xff]
  %v606 = vld [vmem:[%s1 + $0x1d0] sm:$0xf]
  %v607 = vld [vmem:[%s1 + $0x1d4] sm:$0xff]
  %v608 = vld [vmem:[%s1 + $0x1dc] sm:$0xf]
  %v609 = vld [vmem:[%s1 + $0x1e0] sm:$0xff]
  %v610 = vld [vmem:[%s1 + $0x1e8] sm:$0xf]
  %v611 = vld [vmem:[%s1 + $0x1ec] sm:$0xff]
  %v612 = vld [vmem:[%s1 + $0x1f4] sm:$0xf]
  %v613 = vld [vmem:[%s1 + $0x1f8] sm:$0xff]
  %v614 = vld [vmem:[%s1 + $0x200] sm:$0xf]
  %v615 = vld [vmem:[%s1 + $0x204] sm:$0xff]
  %v616 = vld [vmem:[%s1 + $0x20c] sm:$0xf]
  %v617 = vld [vmem:[%s1 + $0x210] sm:$0xff]
  %v618 = vld [vmem:[%s1 + $0x218] sm:$0xf]
  %v619 = vld [vmem:[%s1 + $0x21c] sm:$0xff]
  %v620 = vld [vmem:[%s1 + $0x224] sm:$0xf]
  %v621 = vld [vmem:[%s1 + $0x228] sm:$0xff]
  %v622 = vld [vmem:[%s1 + $0x230] sm:$0xf]
  %v623 = vld [vmem:[%s1 + $0x234] sm:$0xff]
  %v624 = vld [vmem:[%s1 + $0x23c] sm:$0xf]
  %v625 = vld [vmem:[%s1 + $0x240] sm:$0xff]
  %v626 = vld [vmem:[%s1 + $0x248] sm:$0xf]
  %v627 = vld [vmem:[%s1 + $0x24c] sm:$0xff]
  %v628 = vld [vmem:[%s1 + $0x254] sm:$0xf]
  %v629 = vld [vmem:[%s1 + $0x258] sm:$0xff]
  %v630 = vld [vmem:[%s1 + $0x260] sm:$0xf]
  %v631 = vld [vmem:[%s1 + $0x264] sm:$0xff]
  %v632 = vld [vmem:[%s1 + $0x26c] sm:$0xf]
  %v633 = vld [vmem:[%s1 + $0x270] sm:$0xff]
  %v634 = vld [vmem:[%s1 + $0x278] sm:$0xf]
  %v635 = vld [vmem:[%s1 + $0x27c] sm:$0xff]
  %v636 = vld [vmem:[%s1 + $0x284] sm:$0xf]
  %v637 = vld [vmem:[%s1 + $0x288] sm:$0xff]
  %v638 = vld [vmem:[%s1 + $0x290] sm:$0xf]
  %v639 = vld [vmem:[%s1 + $0x294] sm:$0xff]
  %v640 = vld [vmem:[%s1 + $0x29c] sm:$0xf]
  %v641 = vld [vmem:[%s1 + $0x2a0] sm:$0xff]
  %v642 = vld [vmem:[%s1 + $0x2a8] sm:$0xf]
  %v643 = vld [vmem:[%s1 + $0x2ac] sm:$0xff]
  %v644 = vld [vmem:[%s1 + $0x2b4] sm:$0xf]
  %v645 = vld [vmem:[%s1 + $0x2b8] sm:$0xff]
  %v646 = vld [vmem:[%s1 + $0x2c0] sm:$0xf]
  %v647 = vld [vmem:[%s1 + $0x2c4] sm:$0xff]
  %v648 = vld [vmem:[%s1 + $0x2cc] sm:$0xf]
  %v649 = vld [vmem:[%s1 + $0x2d0] sm:$0xff]
  %v650 = vld [vmem:[%s1 + $0x2d8] sm:$0xf]
  %v651 = vld [vmem:[%s1 + $0x2dc] sm:$0xff]
  %v652 = vld [vmem:[%s1 + $0x2e4] sm:$0xf]
  %v653 = vld [vmem:[%s1 + $0x2e8] sm:$0xff]
  %v654 = vld [vmem:[%s1 + $0x2f0] sm:$0xf]
  %v655 = vld [vmem:[%s1 + $0x2f4] sm:$0xff]
  %v656 = vld [vmem:[%s1 + $0x2fc] sm:$0xf]
  %v657 = vld [vmem:[%s1 + $0x300] sm:$0xff]
  %v658 = vld [vmem:[%s1 + $0x308] sm:$0xf]
  %v659 = vld [vmem:[%s1 + $0x30c] sm:$0xff]
  %v660 = vld [vmem:[%s1 + $0x314] sm:$0xf]
  %v661 = vld [vmem:[%s1 + $0x318] sm:$0xff]
  %v662 = vld [vmem:[%s1 + $0x320] sm:$0xf]
  %v663 = vld [vmem:[%s1 + $0x324] sm:$0xff]
  %v664 = vld [vmem:[%s1 + $0x32c] sm:$0xf]
  %v665 = vld [vmem:[%s1 + $0x330] sm:$0xff]
  %v666 = vld [vmem:[%s1 + $0x338] sm:$0xf]
  %v667 = vld [vmem:[%s1 + $0x33c] sm:$0xff]
  %v668 = vld [vmem:[%s1 + $0x344] sm:$0xf]
  %v669 = vld [vmem:[%s1 + $0x348] sm:$0xff]
  %v670 = vld [vmem:[%s1 + $0x350] sm:$0xf]
  %v671 = vld [vmem:[%s1 + $0x354] sm:$0xff]
  %v672 = vld [vmem:[%s1 + $0x35c] sm:$0xf]
  %v673 = vld [vmem:[%s1 + $0x360] sm:$0xff]
  %v674 = vld [vmem:[%s1 + $0x368] sm:$0xf]
  %v675 = vld [vmem:[%s1 + $0x36c] sm:$0xff]
  %v676 = vld [vmem:[%s1 + $0x374] sm:$0xf]
  %v677 = vld [vmem:[%s1 + $0x378] sm:$0xff]
  %v678 = vld [vmem:[%s1 + $0x380] sm:$0xf]
  %v679 = vld [vmem:[%s1 + $0x384] sm:$0xff]
  %v680 = vld [vmem:[%s1 + $0x38c] sm:$0xf]
  %v681 = vld [vmem:[%s1 + $0x390] sm:$0xff]
  %v682 = vld [vmem:[%s1 + $0x398] sm:$0xf]
  %v683 = vld [vmem:[%s1 + $0x39c] sm:$0xff]
  %v684 = vld [vmem:[%s1 + $0x3a4] sm:$0xf]
  %v685 = vld [vmem:[%s1 + $0x3a8] sm:$0xff]
  %v686 = vld [vmem:[%s1 + $0x3b0] sm:$0xf]
  %v687 = vld [vmem:[%s1 + $0x3b4] sm:$0xff]
  %v688 = vld [vmem:[%s1 + $0x3bc] sm:$0xf]
  %v689 = vld [vmem:[%s2] sm:$0x7]
  %v691 = vlaneseq
  %v692 = vshrl.u32 %v691, 7
  %v693 = vsub.s32 0, %v692
  %v694 = vrot.slane %v689, %v693
  %v695 = vlaneseq
  %v696 = vshrl.u32 %v695, 7
  %v697 = vsub.s32 1, %v696
  %v698 = vrot.slane %v689, %v697
  %v699 = vlaneseq
  %v700 = vshrl.u32 %v699, 7
  %v701 = vsub.s32 2, %v700
  %v702 = vrot.slane %v689, %v701
  %v866 = vunpack.c.l.b16 %v529
  %v867 = vunpack.c.h.b16 %v529
  %v868 = vunpack.c.l.b16 %v530
  %v869 = vunpack.c.l.b16 %v531
  %v870 = vunpack.c.h.b16 %v531
  %v871 = vunpack.c.l.b16 %v532
  %v872 = vunpack.c.l.b16 %v533
  %v873 = vunpack.c.h.b16 %v533
  %v874 = vunpack.c.l.b16 %v534
  %v875 = vunpack.c.l.b16 %v535
  %v876 = vunpack.c.h.b16 %v535
  %v877 = vunpack.c.l.b16 %v536
  %v878 = vunpack.c.l.b16 %v537
  %v879 = vunpack.c.h.b16 %v537
  %v880 = vunpack.c.l.b16 %v538
  %v881 = vunpack.c.l.b16 %v539
  %v882 = vunpack.c.h.b16 %v539
  %v883 = vunpack.c.l.b16 %v540
  %v884 = vunpack.c.l.b16 %v541
  %v885 = vunpack.c.h.b16 %v541
  %v886 = vunpack.c.l.b16 %v542
  %v887 = vunpack.c.l.b16 %v543
  %v888 = vunpack.c.h.b16 %v543
  %v889 = vunpack.c.l.b16 %v544
  %v890 = vunpack.c.l.b16 %v545
  %v891 = vunpack.c.h.b16 %v545
  %v892 = vunpack.c.l.b16 %v546
  %v893 = vunpack.c.l.b16 %v547
  %v894 = vunpack.c.h.b16 %v547
  %v895 = vunpack.c.l.b16 %v548
  %v896 = vunpack.c.l.b16 %v549
  %v897 = vunpack.c.h.b16 %v549
  %v898 = vunpack.c.l.b16 %v550
  %v899 = vunpack.c.l.b16 %v551
  %v900 = vunpack.c.h.b16 %v551
  %v901 = vunpack.c.l.b16 %v552
  %v902 = vunpack.c.l.b16 %v553
  %v903 = vunpack.c.h.b16 %v553
  %v904 = vunpack.c.l.b16 %v554
  %v905 = vunpack.c.l.b16 %v555
  %v906 = vunpack.c.h.b16 %v555
  %v907 = vunpack.c.l.b16 %v556
  %v908 = vunpack.c.l.b16 %v557
  %v909 = vunpack.c.h.b16 %v557
  %v910 = vunpack.c.l.b16 %v558
  %v911 = vunpack.c.l.b16 %v559
  %v912 = vunpack.c.h.b16 %v559
  %v913 = vunpack.c.l.b16 %v560
  %v914 = vunpack.c.l.b16 %v561
  %v915 = vunpack.c.h.b16 %v561
  %v916 = vunpack.c.l.b16 %v562
  %v917 = vunpack.c.l.b16 %v563
  %v918 = vunpack.c.h.b16 %v563
  %v919 = vunpack.c.l.b16 %v564
  %v920 = vunpack.c.l.b16 %v565
  %v921 = vunpack.c.h.b16 %v565
  %v922 = vunpack.c.l.b16 %v566
  %v923 = vunpack.c.l.b16 %v567
  %v924 = vunpack.c.h.b16 %v567
  %v925 = vunpack.c.l.b16 %v568
  %v926 = vunpack.c.l.b16 %v569
  %v927 = vunpack.c.h.b16 %v569
  %v928 = vunpack.c.l.b16 %v570
  %v929 = vunpack.c.l.b16 %v571
  %v930 = vunpack.c.h.b16 %v571
  %v931 = vunpack.c.l.b16 %v572
  %v932 = vunpack.c.l.b16 %v573
  %v933 = vunpack.c.h.b16 %v573
  %v934 = vunpack.c.l.b16 %v574
  %v935 = vunpack.c.l.b16 %v575
  %v936 = vunpack.c.h.b16 %v575
  %v937 = vunpack.c.l.b16 %v576
  %v938 = vunpack.c.l.b16 %v577
  %v939 = vunpack.c.h.b16 %v577
  %v940 = vunpack.c.l.b16 %v578
  %v941 = vunpack.c.l.b16 %v579
  %v942 = vunpack.c.h.b16 %v579
  %v943 = vunpack.c.l.b16 %v580
  %v944 = vunpack.c.l.b16 %v581
  %v945 = vunpack.c.h.b16 %v581
  %v946 = vunpack.c.l.b16 %v582
  %v947 = vunpack.c.l.b16 %v583
  %v948 = vunpack.c.h.b16 %v583
  %v949 = vunpack.c.l.b16 %v584
  %v950 = vunpack.c.l.b16 %v585
  %v951 = vunpack.c.h.b16 %v585
  %v952 = vunpack.c.l.b16 %v586
  %v953 = vunpack.c.l.b16 %v587
  %v954 = vunpack.c.h.b16 %v587
  %v955 = vunpack.c.l.b16 %v588
  %v956 = vunpack.c.l.b16 %v589
  %v957 = vunpack.c.h.b16 %v589
  %v958 = vunpack.c.l.b16 %v590
  %v959 = vunpack.c.l.b16 %v591
  %v960 = vunpack.c.h.b16 %v591
  %v961 = vunpack.c.l.b16 %v592
  %v962 = vunpack.c.l.b16 %v593
  %v963 = vunpack.c.h.b16 %v593
  %v964 = vunpack.c.l.b16 %v594
  %v965 = vunpack.c.l.b16 %v595
  %v966 = vunpack.c.h.b16 %v595
  %v967 = vunpack.c.l.b16 %v596
  %v968 = vunpack.c.l.b16 %v597
  %v969 = vunpack.c.h.b16 %v597
  %v970 = vunpack.c.l.b16 %v598
  %v971 = vunpack.c.l.b16 %v599
  %v972 = vunpack.c.h.b16 %v599
  %v973 = vunpack.c.l.b16 %v600
  %v974 = vunpack.c.l.b16 %v601
  %v975 = vunpack.c.h.b16 %v601
  %v976 = vunpack.c.l.b16 %v602
  %v977 = vunpack.c.l.b16 %v603
  %v978 = vunpack.c.h.b16 %v603
  %v979 = vunpack.c.l.b16 %v604
  %v980 = vunpack.c.l.b16 %v605
  %v981 = vunpack.c.h.b16 %v605
  %v982 = vunpack.c.l.b16 %v606
  %v983 = vunpack.c.l.b16 %v607
  %v984 = vunpack.c.h.b16 %v607
  %v985 = vunpack.c.l.b16 %v608
  %v986 = vunpack.c.l.b16 %v609
  %v987 = vunpack.c.h.b16 %v609
  %v988 = vunpack.c.l.b16 %v610
  %v989 = vunpack.c.l.b16 %v611
  %v990 = vunpack.c.h.b16 %v611
  %v991 = vunpack.c.l.b16 %v612
  %v992 = vunpack.c.l.b16 %v613
  %v993 = vunpack.c.h.b16 %v613
  %v994 = vunpack.c.l.b16 %v614
  %v995 = vunpack.c.l.b16 %v615
  %v996 = vunpack.c.h.b16 %v615
  %v997 = vunpack.c.l.b16 %v616
  %v998 = vunpack.c.l.b16 %v617
  %v999 = vunpack.c.h.b16 %v617
  %v1000 = vunpack.c.l.b16 %v618
  %v1001 = vunpack.c.l.b16 %v619
  %v1002 = vunpack.c.h.b16 %v619
  %v1003 = vunpack.c.l.b16 %v620
  %v1004 = vunpack.c.l.b16 %v621
  %v1005 = vunpack.c.h.b16 %v621
  %v1006 = vunpack.c.l.b16 %v622
  %v1007 = vunpack.c.l.b16 %v623
  %v1008 = vunpack.c.h.b16 %v623
  %v1009 = vunpack.c.l.b16 %v624
  %v1010 = vunpack.c.l.b16 %v625
  %v1011 = vunpack.c.h.b16 %v625
  %v1012 = vunpack.c.l.b16 %v626
  %v1013 = vunpack.c.l.b16 %v627
  %v1014 = vunpack.c.h.b16 %v627
  %v1015 = vunpack.c.l.b16 %v628
  %v1016 = vunpack.c.l.b16 %v629
  %v1017 = vunpack.c.h.b16 %v629
  %v1018 = vunpack.c.l.b16 %v630
  %v1019 = vunpack.c.l.b16 %v631
  %v1020 = vunpack.c.h.b16 %v631
  %v1021 = vunpack.c.l.b16 %v632
  %v1022 = vunpack.c.l.b16 %v633
  %v1023 = vunpack.c.h.b16 %v633
  %v1024 = vunpack.c.l.b16 %v634
  %v1025 = vunpack.c.l.b16 %v635
  %v1026 = vunpack.c.h.b16 %v635
  %v1027 = vunpack.c.l.b16 %v636
  %v1028 = vunpack.c.l.b16 %v637
  %v1029 = vunpack.c.h.b16 %v637
  %v1030 = vunpack.c.l.b16 %v638
  %v1031 = vunpack.c.l.b16 %v639
  %v1032 = vunpack.c.h.b16 %v639
  %v1033 = vunpack.c.l.b16 %v640
  %v1034 = vunpack.c.l.b16 %v641
  %v1035 = vunpack.c.h.b16 %v641
  %v1036 = vunpack.c.l.b16 %v642
  %v1037 = vunpack.c.l.b16 %v643
  %v1038 = vunpack.c.h.b16 %v643
  %v1039 = vunpack.c.l.b16 %v644
  %v1040 = vunpack.c.l.b16 %v645
  %v1041 = vunpack.c.h.b16 %v645
  %v1042 = vunpack.c.l.b16 %v646
  %v1043 = vunpack.c.l.b16 %v647
  %v1044 = vunpack.c.h.b16 %v647
  %v1045 = vunpack.c.l.b16 %v648
  %v1046 = vunpack.c.l.b16 %v649
  %v1047 = vunpack.c.h.b16 %v649
  %v1048 = vunpack.c.l.b16 %v650
  %v1049 = vunpack.c.l.b16 %v651
  %v1050 = vunpack.c.h.b16 %v651
  %v1051 = vunpack.c.l.b16 %v652
  %v1052 = vunpack.c.l.b16 %v653
  %v1053 = vunpack.c.h.b16 %v653
  %v1054 = vunpack.c.l.b16 %v654
  %v1055 = vunpack.c.l.b16 %v655
  %v1056 = vunpack.c.h.b16 %v655
  %v1057 = vunpack.c.l.b16 %v656
  %v1058 = vunpack.c.l.b16 %v657
  %v1059 = vunpack.c.h.b16 %v657
  %v1060 = vunpack.c.l.b16 %v658
  %v1061 = vunpack.c.l.b16 %v659
  %v1062 = vunpack.c.h.b16 %v659
  %v1063 = vunpack.c.l.b16 %v660
  %v1064 = vunpack.c.l.b16 %v661
  %v1065 = vunpack.c.h.b16 %v661
  %v1066 = vunpack.c.l.b16 %v662
  %v1067 = vunpack.c.l.b16 %v663
  %v1068 = vunpack.c.h.b16 %v663
  %v1069 = vunpack.c.l.b16 %v664
  %v1070 = vunpack.c.l.b16 %v665
  %v1071 = vunpack.c.h.b16 %v665
  %v1072 = vunpack.c.l.b16 %v666
  %v1073 = vunpack.c.l.b16 %v667
  %v1074 = vunpack.c.h.b16 %v667
  %v1075 = vunpack.c.l.b16 %v668
  %v1076 = vunpack.c.l.b16 %v669
  %v1077 = vunpack.c.h.b16 %v669
  %v1078 = vunpack.c.l.b16 %v670
  %v1079 = vunpack.c.l.b16 %v671
  %v1080 = vunpack.c.h.b16 %v671
  %v1081 = vunpack.c.l.b16 %v672
  %v1082 = vunpack.c.l.b16 %v673
  %v1083 = vunpack.c.h.b16 %v673
  %v1084 = vunpack.c.l.b16 %v674
  %v1085 = vunpack.c.l.b16 %v675
  %v1086 = vunpack.c.h.b16 %v675
  %v1087 = vunpack.c.l.b16 %v676
  %v1088 = vunpack.c.l.b16 %v677
  %v1089 = vunpack.c.h.b16 %v677
  %v1090 = vunpack.c.l.b16 %v678
  %v1091 = vunpack.c.l.b16 %v679
  %v1092 = vunpack.c.h.b16 %v679
  %v1093 = vunpack.c.l.b16 %v680
  %v1094 = vunpack.c.l.b16 %v681
  %v1095 = vunpack.c.h.b16 %v681
  %v1096 = vunpack.c.l.b16 %v682
  %v1097 = vunpack.c.l.b16 %v683
  %v1098 = vunpack.c.h.b16 %v683
  %v1099 = vunpack.c.l.b16 %v684
  %v1100 = vunpack.c.l.b16 %v685
  %v1101 = vunpack.c.h.b16 %v685
  %v1102 = vunpack.c.l.b16 %v686
  %v1103 = vunpack.c.l.b16 %v687
  %v1104 = vunpack.c.h.b16 %v687
  %v1105 = vunpack.c.l.b16 %v688
  %v1106 = vpack.c.b16 %v869, %v866
  %v1107 = vpack.c.b16 %v870, %v867
  %v1108 = vpack.c.b16 %v871, %v868
  %v1109 = vpack.c.b16 %v875, %v872
  %v1110 = vpack.c.b16 %v876, %v873
  %v1111 = vpack.c.b16 %v877, %v874
  %v1112 = vpack.c.b16 %v881, %v878
  %v1113 = vpack.c.b16 %v882, %v879
  %v1114 = vpack.c.b16 %v883, %v880
  %v1115 = vpack.c.b16 %v887, %v884
  %v1116 = vpack.c.b16 %v888, %v885
  %v1117 = vpack.c.b16 %v889, %v886
  %v1118 = vpack.c.b16 %v893, %v890
  %v1119 = vpack.c.b16 %v894, %v891
  %v1120 = vpack.c.b16 %v895, %v892
  %v1121 = vpack.c.b16 %v899, %v896
  %v1122 = vpack.c.b16 %v900, %v897
  %v1123 = vpack.c.b16 %v901, %v898
  %v1124 = vpack.c.b16 %v905, %v902
  %v1125 = vpack.c.b16 %v906, %v903
  %v1126 = vpack.c.b16 %v907, %v904
  %v1127 = vpack.c.b16 %v911, %v908
  %v1128 = vpack.c.b16 %v912, %v909
  %v1129 = vpack.c.b16 %v913, %v910
  %v1130 = vpack.c.b16 %v917, %v914
  %v1131 = vpack.c.b16 %v918, %v915
  %v1132 = vpack.c.b16 %v919, %v916
  %v1133 = vpack.c.b16 %v923, %v920
  %v1134 = vpack.c.b16 %v924, %v921
  %v1135 = vpack.c.b16 %v925, %v922
  %v1136 = vpack.c.b16 %v929, %v926
  %v1137 = vpack.c.b16 %v930, %v927
  %v1138 = vpack.c.b16 %v931, %v928
  %v1139 = vpack.c.b16 %v935, %v932
  %v1140 = vpack.c.b16 %v936, %v933
  %v1141 = vpack.c.b16 %v937, %v934
  %v1142 = vpack.c.b16 %v941, %v938
  %v1143 = vpack.c.b16 %v942, %v939
  %v1144 = vpack.c.b16 %v943, %v940
  %v1145 = vpack.c.b16 %v947, %v944
  %v1146 = vpack.c.b16 %v948, %v945
  %v1147 = vpack.c.b16 %v949, %v946
  %v1148 = vpack.c.b16 %v953, %v950
  %v1149 = vpack.c.b16 %v954, %v951
  %v1150 = vpack.c.b16 %v955, %v952
  %v1151 = vpack.c.b16 %v959, %v956
  %v1152 = vpack.c.b16 %v960, %v957
  %v1153 = vpack.c.b16 %v961, %v958
  %v1154 = vpack.c.b16 %v965, %v962
  %v1155 = vpack.c.b16 %v966, %v963
  %v1156 = vpack.c.b16 %v967, %v964
  %v1157 = vpack.c.b16 %v971, %v968
  %v1158 = vpack.c.b16 %v972, %v969
  %v1159 = vpack.c.b16 %v973, %v970
  %v1160 = vpack.c.b16 %v977, %v974
  %v1161 = vpack.c.b16 %v978, %v975
  %v1162 = vpack.c.b16 %v979, %v976
  %v1163 = vpack.c.b16 %v983, %v980
  %v1164 = vpack.c.b16 %v984, %v981
  %v1165 = vpack.c.b16 %v985, %v982
  %v1166 = vpack.c.b16 %v989, %v986
  %v1167 = vpack.c.b16 %v990, %v987
  %v1168 = vpack.c.b16 %v991, %v988
  %v1169 = vpack.c.b16 %v995, %v992
  %v1170 = vpack.c.b16 %v996, %v993
  %v1171 = vpack.c.b16 %v997, %v994
  %v1172 = vpack.c.b16 %v1001, %v998
  %v1173 = vpack.c.b16 %v1002, %v999
  %v1174 = vpack.c.b16 %v1003, %v1000
  %v1175 = vpack.c.b16 %v1007, %v1004
  %v1176 = vpack.c.b16 %v1008, %v1005
  %v1177 = vpack.c.b16 %v1009, %v1006
  %v1178 = vpack.c.b16 %v1013, %v1010
  %v1179 = vpack.c.b16 %v1014, %v1011
  %v1180 = vpack.c.b16 %v1015, %v1012
  %v1181 = vpack.c.b16 %v1019, %v1016
  %v1182 = vpack.c.b16 %v1020, %v1017
  %v1183 = vpack.c.b16 %v1021, %v1018
  %v1184 = vpack.c.b16 %v1025, %v1022
  %v1185 = vpack.c.b16 %v1026, %v1023
  %v1186 = vpack.c.b16 %v1027, %v1024
  %v1187 = vpack.c.b16 %v1031, %v1028
  %v1188 = vpack.c.b16 %v1032, %v1029
  %v1189 = vpack.c.b16 %v1033, %v1030
  %v1190 = vpack.c.b16 %v1037, %v1034
  %v1191 = vpack.c.b16 %v1038, %v1035
  %v1192 = vpack.c.b16 %v1039, %v1036
  %v1193 = vpack.c.b16 %v1043, %v1040
  %v1194 = vpack.c.b16 %v1044, %v1041
  %v1195 = vpack.c.b16 %v1045, %v1042
  %v1196 = vpack.c.b16 %v1049, %v1046
  %v1197 = vpack.c.b16 %v1050, %v1047
  %v1198 = vpack.c.b16 %v1051, %v1048
  %v1199 = vpack.c.b16 %v1055, %v1052
  %v1200 = vpack.c.b16 %v1056, %v1053
  %v1201 = vpack.c.b16 %v1057, %v1054
  %v1202 = vpack.c.b16 %v1061, %v1058
  %v1203 = vpack.c.b16 %v1062, %v1059
  %v1204 = vpack.c.b16 %v1063, %v1060
  %v1205 = vpack.c.b16 %v1067, %v1064
  %v1206 = vpack.c.b16 %v1068, %v1065
  %v1207 = vpack.c.b16 %v1069, %v1066
  %v1208 = vpack.c.b16 %v1073, %v1070
  %v1209 = vpack.c.b16 %v1074, %v1071
  %v1210 = vpack.c.b16 %v1075, %v1072
  %v1211 = vpack.c.b16 %v1079, %v1076
  %v1212 = vpack.c.b16 %v1080, %v1077
  %v1213 = vpack.c.b16 %v1081, %v1078
  %v1214 = vpack.c.b16 %v1085, %v1082
  %v1215 = vpack.c.b16 %v1086, %v1083
  %v1216 = vpack.c.b16 %v1087, %v1084
  %v1217 = vpack.c.b16 %v1091, %v1088
  %v1218 = vpack.c.b16 %v1092, %v1089
  %v1219 = vpack.c.b16 %v1093, %v1090
  %v1220 = vpack.c.b16 %v1097, %v1094
  %v1221 = vpack.c.b16 %v1098, %v1095
  %v1222 = vpack.c.b16 %v1099, %v1096
  %v1223 = vpack.c.b16 %v1103, %v1100
  %v1224 = vpack.c.b16 %v1104, %v1101
  %v1225 = vpack.c.b16 %v1105, %v1102
  %1346 = vmatprep.subr.bf16.mxu0 %v1107
  %1347 = vmatpush1.bf16.msra.mxu0 %v1106
  %1348 = vmatprep.subr.bf16.mxu0 %v1110
  %1349 = vmatpush1.bf16.msra.mxu0 %v1109
  %1350 = vmatprep.subr.bf16.mxu0 %v1113
  %1351 = vmatpush1.bf16.msra.mxu0 %v1112
  %1352 = vmatprep.subr.bf16.mxu0 %v1116
  %1353 = vmatpush1.bf16.msra.mxu0 %v1115
  %1354 = vmatprep.subr.bf16.mxu0 %v1119
  %1355 = vmatpush1.bf16.msra.mxu0 %v1118
  %1356 = vmatprep.subr.bf16.mxu0 %v1122
  %1357 = vmatpush1.bf16.msra.mxu0 %v1121
  %1358 = vmatprep.subr.bf16.mxu0 %v1125
  %1359 = vmatpush1.bf16.msra.mxu0 %v1124
  %1360 = vmatprep.subr.bf16.mxu0 %v1128
  %1361 = vmatpush1.bf16.msra.mxu0 %v1127
  %1362 = vmatprep.subr.bf16.mxu0 %v1131
  %1363 = vmatpush1.bf16.msra.mxu0 %v1130
  %1364 = vmatprep.subr.bf16.mxu0 %v1134
  %1365 = vmatpush1.bf16.msra.mxu0 %v1133
  %1366 = vmatprep.subr.bf16.mxu0 %v1137
  %1367 = vmatpush1.bf16.msra.mxu0 %v1136
  %1368 = vmatprep.subr.bf16.mxu0 %v1140
  %1369 = vmatpush1.bf16.msra.mxu0 %v1139
  %1370 = vmatprep.subr.bf16.mxu0 %v1143
  %1371 = vmatpush1.bf16.msra.mxu0 %v1142
  %1372 = vmatprep.subr.bf16.mxu0 %v1146
  %1373 = vmatpush1.bf16.msra.mxu0 %v1145
  %1374 = vmatprep.subr.bf16.mxu0 %v1149
  %1375 = vmatpush1.bf16.msra.mxu0 %v1148
  %1376 = vmatprep.subr.bf16.mxu0 %v1152
  %1377 = vmatpush1.bf16.msra.mxu0 %v1151
  %1378 = vmatprep.mubr.bf16.mxu0 %v153
  %1379 = vmatmul.mubr.bf16.gmra.mrb[0].mxu0 %v101
  %v1380 = vpop.f32.mrb[0].mxu0
  %v1381 = vadd.f32 %v694, %v1380
  %v1382 = vpop.f32.mrb[0].mxu0
  %v1383 = vadd.f32 %v698, %v1382
  %v1384 = vpop.f32.mrb[0].mxu0
  %v1385 = vadd.f32 %v694, %v1384
  %v1386 = vpop.f32.mrb[0].mxu0
  %v1387 = vadd.f32 %v698, %v1386
  %1388 = vmatprep.mubr.bf16.mxu0 %v165
  %1389 = vmatmul.mubr.bf16.gmra.mrb[0].mxu0 %v102
  %v1390 = vpop.f32.mrb[0].mxu0
  %v1391 = vadd.f32 %v694, %v1390
  %v1392 = vpop.f32.mrb[0].mxu0
  %v1393 = vadd.f32 %v698, %v1392
  %v1394 = vpop.f32.mrb[0].mxu0
  %v1395 = vadd.f32 %v694, %v1394
  %v1396 = vpop.f32.mrb[0].mxu0
  %v1397 = vadd.f32 %v698, %v1396
  %1398 = vmatprep.mubr.bf16.mxu0 %v177
  %1399 = vmatmul.mubr.bf16.gmra.mrb[0].mxu0 %v103
  %v1400 = vpop.f32.mrb[0].mxu0
  %v1401 = vadd.f32 %v694, %v1400
  %v1402 = vpop.f32.mrb[0].mxu0
  %v1403 = vadd.f32 %v698, %v1402
  %v1404 = vpop.f32.mrb[0].mxu0
  %v1405 = vadd.f32 %v694, %v1404
  %v1406 = vpop.f32.mrb[0].mxu0
  %v1407 = vadd.f32 %v698, %v1406
  %1408 = vmatprep.mubr.bf16.mxu0 %v189
  %1409 = vmatmul.mubr.bf16.gmra.mrb[0].mxu0 %v104
  %v1410 = vpop.f32.mrb[0].mxu0
  %v1411 = vadd.f32 %v694, %v1410
  %v1412 = vpop.f32.mrb[0].mxu0
  %v1413 = vadd.f32 %v698, %v1412
  %v1414 = vpop.f32.mrb[0].mxu0
  %v1415 = vadd.f32 %v694, %v1414
  %v1416 = vpop.f32.mrb[0].mxu0
  %v1417 = vadd.f32 %v698, %v1416
  %1418 = vmatprep.mubr.bf16.mxu0 %v201
  %1419 = vmatmul.mubr.bf16.gmra.mrb[0].mxu0 %v105
  %v1420 = vpop.f32.mrb[0].mxu0
  %v1421 = vadd.f32 %v694, %v1420
  %v1422 = vpop.f32.mrb[0].mxu0
  %v1423 = vadd.f32 %v698, %v1422
  %v1424 = vpop.f32.mrb[0].mxu0
  %v1425 = vadd.f32 %v694, %v1424
  %v1426 = vpop.f32.mrb[0].mxu0
  %v1427 = vadd.f32 %v698, %v1426
  %1428 = vmatprep.mubr.bf16.mxu0 %v213
  %1429 = vmatmul.mubr.bf16.gmra.mrb[0].mxu0 %v106
  %v1430 = vpop.f32.mrb[0].mxu0
  %v1431 = vadd.f32 %v694, %v1430
  %v1432 = vpop.f32.mrb[0].mxu0
  %v1433 = vadd.f32 %v698, %v1432
  %v1434 = vpop.f32.mrb[0].mxu0
  %v1435 = vadd.f32 %v694, %v1434
  %v1436 = vpop.f32.mrb[0].mxu0
  %v1437 = vadd.f32 %v698, %v1436
  %1438 = vmatprep.mubr.bf16.mxu0 %v225
  %1439 = vmatmul.mubr.bf16.gmra.mrb[0].mxu0 %v107
  %v1440 = vpop.f32.mrb[0].mxu0
  %v1441 = vadd.f32 %v694, %v1440
  %v1442 = vpop.f32.mrb[0].mxu0
  %v1443 = vadd.f32 %v698, %v1442
  %v1444 = vpop.f32.mrb[0].mxu0
  %v1445 = vadd.f32 %v694, %v1444
  %v1446 = vpop.f32.mrb[0].mxu0
  %v1447 = vadd.f32 %v698, %v1446
  %1448 = vmatprep.mubr.bf16.mxu0 %v237
  %1449 = vmatmul.mubr.bf16.gmra.mrb[0].mxu0 %v108
  %v1450 = vpop.f32.mrb[0].mxu0
  %v1451 = vadd.f32 %v694, %v1450
  %v1452 = vpop.f32.mrb[0].mxu0
  %v1453 = vadd.f32 %v698, %v1452
  %v1454 = vpop.f32.mrb[0].mxu0
  %v1455 = vadd.f32 %v694, %v1454
  %v1456 = vpop.f32.mrb[0].mxu0
  %v1457 = vadd.f32 %v698, %v1456
  %1458 = vdwg.mxu0
  %1459 = vmatprep.subr.bf16.mxu0 %v1155
  %1460 = vmatpush1.bf16.msra.mxu0 %v1154
  %1461 = vmatprep.subr.bf16.mxu0 %v1158
  %1462 = vmatpush1.bf16.msra.mxu0 %v1157
  %1463 = vmatprep.subr.bf16.mxu0 %v1161
  %1464 = vmatpush1.bf16.msra.mxu0 %v1160
  %1465 = vmatprep.subr.bf16.mxu0 %v1164
  %1466 = vmatpush1.bf16.msra.mxu0 %v1163
  %1467 = vmatprep.subr.bf16.mxu0 %v1167
  %1468 = vmatpush1.bf16.msra.mxu0 %v1166
  %1469 = vmatprep.subr.bf16.mxu0 %v1170
  %1470 = vmatpush1.bf16.msra.mxu0 %v1169
  %1471 = vmatprep.subr.bf16.mxu0 %v1173
  %1472 = vmatpush1.bf16.msra.mxu0 %v1172
  %1473 = vmatprep.subr.bf16.mxu0 %v1176
  %1474 = vmatpush1.bf16.msra.mxu0 %v1175
  %1475 = vmatprep.subr.bf16.mxu0 %v1179
  %1476 = vmatpush1.bf16.msra.mxu0 %v1178
  %1477 = vmatprep.subr.bf16.mxu0 %v1182
  %1478 = vmatpush1.bf16.msra.mxu0 %v1181
  %1479 = vmatprep.subr.bf16.mxu0 %v1185
  %1480 = vmatpush1.bf16.msra.mxu0 %v1184
  %1481 = vmatprep.subr.bf16.mxu0 %v1188
  %1482 = vmatpush1.bf16.msra.mxu0 %v1187
  %1483 = vmatprep.subr.bf16.mxu0 %v1191
  %1484 = vmatpush1.bf16.msra.mxu0 %v1190
  %1485 = vmatprep.subr.bf16.mxu0 %v1194
  %1486 = vmatpush1.bf16.msra.mxu0 %v1193
  %1487 = vmatprep.subr.bf16.mxu0 %v1197
  %1488 = vmatpush1.bf16.msra.mxu0 %v1196
  %1489 = vmatprep.subr.bf16.mxu0 %v1200
  %1490 = vmatpush1.bf16.msra.mxu0 %v1199
  %1491 = vmatprep.mubr.bf16.mxu0 %v344
  %1492 = vmatmul.mubr.bf16.gmra.mrb[0].mxu0 %v273
  %v1493 = vpop.f32.mrb[0].mxu0
  %v1494 = vadd.f32 %v1381, %v1493
  %v1495 = vpop.f32.mrb[0].mxu0
  %v1496 = vadd.f32 %v1383, %v1495
  %v1497 = vpop.f32.mrb[0].mxu0
  %v1498 = vadd.f32 %v1385, %v1497
  %v1499 = vpop.f32.mrb[0].mxu0
  %v1500 = vadd.f32 %v1387, %v1499
  %1501 = vmatprep.mubr.bf16.mxu0 %v361
  %1502 = vmatmul.mubr.bf16.gmra.mrb[0].mxu0 %v276
  %v1503 = vpop.f32.mrb[0].mxu0
  %v1504 = vadd.f32 %v1391, %v1503
  %v1505 = vpop.f32.mrb[0].mxu0
  %v1506 = vadd.f32 %v1393, %v1505
  %v1507 = vpop.f32.mrb[0].mxu0
  %v1508 = vadd.f32 %v1395, %v1507
  %v1509 = vpop.f32.mrb[0].mxu0
  %v1510 = vadd.f32 %v1397, %v1509
  %1511 = vmatprep.mubr.bf16.mxu0 %v378
  %1512 = vmatmul.mubr.bf16.gmra.mrb[0].mxu0 %v279
  %v1513 = vpop.f32.mrb[0].mxu0
  %v1514 = vadd.f32 %v1401, %v1513
  %v1515 = vpop.f32.mrb[0].mxu0
  %v1516 = vadd.f32 %v1403, %v1515
  %v1517 = vpop.f32.mrb[0].mxu0
  %v1518 = vadd.f32 %v1405, %v1517
  %v1519 = vpop.f32.mrb[0].mxu0
  %v1520 = vadd.f32 %v1407, %v1519
  %1521 = vmatprep.mubr.bf16.mxu0 %v395
  %1522 = vmatmul.mubr.bf16.gmra.mrb[0].mxu0 %v282
  %v1523 = vpop.f32.mrb[0].mxu0
  %v1524 = vadd.f32 %v1411, %v1523
  %v1525 = vpop.f32.mrb[0].mxu0
  %v1526 = vadd.f32 %v1413, %v1525
  %v1527 = vpop.f32.mrb[0].mxu0
  %v1528 = vadd.f32 %v1415, %v1527
  %v1529 = vpop.f32.mrb[0].mxu0
  %v1530 = vadd.f32 %v1417, %v1529
  %1531 = vmatprep.mubr.bf16.mxu0 %v412
  %1532 = vmatmul.mubr.bf16.gmra.mrb[0].mxu0 %v285
  %v1533 = vpop.f32.mrb[0].mxu0
  %v1534 = vadd.f32 %v1421, %v1533
  %v1535 = vpop.f32.mrb[0].mxu0
  %v1536 = vadd.f32 %v1423, %v1535
  %v1537 = vpop.f32.mrb[0].mxu0
  %v1538 = vadd.f32 %v1425, %v1537
  %v1539 = vpop.f32.mrb[0].mxu0
  %v1540 = vadd.f32 %v1427, %v1539
  %1541 = vmatprep.mubr.bf16.mxu0 %v429
  %1542 = vmatmul.mubr.bf16.gmra.mrb[0].mxu0 %v288
  %v1543 = vpop.f32.mrb[0].mxu0
  %v1544 = vadd.f32 %v1431, %v1543
  %v1545 = vpop.f32.mrb[0].mxu0
  %v1546 = vadd.f32 %v1433, %v1545
  %v1547 = vpop.f32.mrb[0].mxu0
  %v1548 = vadd.f32 %v1435, %v1547
  %v1549 = vpop.f32.mrb[0].mxu0
  %v1550 = vadd.f32 %v1437, %v1549
  %1551 = vmatprep.mubr.bf16.mxu0 %v446
  %1552 = vmatmul.mubr.bf16.gmra.mrb[0].mxu0 %v291
  %v1553 = vpop.f32.mrb[0].mxu0
  %v1554 = vadd.f32 %v1441, %v1553
  %v1555 = vpop.f32.mrb[0].mxu0
  %v1556 = vadd.f32 %v1443, %v1555
  %v1557 = vpop.f32.mrb[0].mxu0
  %v1558 = vadd.f32 %v1445, %v1557
  %v1559 = vpop.f32.mrb[0].mxu0
  %v1560 = vadd.f32 %v1447, %v1559
  %1561 = vmatprep.mubr.bf16.mxu0 %v463
  %1562 = vmatmul.mubr.bf16.gmra.mrb[0].mxu0 %v294
  %v1563 = vpop.f32.mrb[0].mxu0
  %v1564 = vadd.f32 %v1451, %v1563
  %v1565 = vpop.f32.mrb[0].mxu0
  %v1566 = vadd.f32 %v1453, %v1565
  %v1567 = vpop.f32.mrb[0].mxu0
  %v1568 = vadd.f32 %v1455, %v1567
  %v1569 = vpop.f32.mrb[0].mxu0
  %v1570 = vadd.f32 %v1457, %v1569
  %1571 = vdwg.mxu0
  %1572 = vmatprep.subr.bf16.mxu0 %v1203
  %1573 = vmatpush1.bf16.msra.mxu0 %v1202
  %1574 = vmatprep.subr.bf16.mxu0 %v1206
  %1575 = vmatpush1.bf16.msra.mxu0 %v1205
  %1576 = vmatprep.subr.bf16.mxu0 %v1209
  %1577 = vmatpush1.bf16.msra.mxu0 %v1208
  %1578 = vmatprep.subr.bf16.mxu0 %v1212
  %1579 = vmatpush1.bf16.msra.mxu0 %v1211
  %1580 = vmatprep.subr.bf16.mxu0 %v1215
  %1581 = vmatpush1.bf16.msra.mxu0 %v1214
  %1582 = vmatprep.subr.bf16.mxu0 %v1218
  %1583 = vmatpush1.bf16.msra.mxu0 %v1217
  %1584 = vmatprep.subr.bf16.mxu0 %v1221
  %1585 = vmatpush1.bf16.msra.mxu0 %v1220
  %1586 = vmatprep.subr.bf16.mxu0 %v1224
  %1587 = vmatpush1.bf16.msra.mxu0 %v1223
  %1588 = vmatprep.subr.bf16.mxu0 0
  %1589 = vmatpush1.bf16.msra.mxu0 0
  %1590 = vmatprep.subr.bf16.mxu0 0
  %1591 = vmatpush1.bf16.msra.mxu0 0
  %1592 = vmatprep.subr.bf16.mxu0 0
  %1593 = vmatpush1.bf16.msra.mxu0 0
  %1594 = vmatprep.subr.bf16.mxu0 0
  %1595 = vmatpush1.bf16.msra.mxu0 0
  %1596 = vmatprep.subr.bf16.mxu0 0
  %1597 = vmatpush1.bf16.msra.mxu0 0
  %1598 = vmatprep.subr.bf16.mxu0 0
  %1599 = vmatpush1.bf16.msra.mxu0 0
  %1600 = vmatprep.subr.bf16.mxu0 0
  %1601 = vmatpush1.bf16.msra.mxu0 0
  %1602 = vmatprep.subr.bf16.mxu0 0
  %1603 = vmatpush1.bf16.msra.mxu0 0
  %1604 = vmatprep.mubr.bf16.mxu0 0
  %1605 = vmatmul.mubr.bf16.gmra.mrb[0].mxu0 %v499
  %v1606 = vpop.f32.mrb[0].mxu0
  %v1607 = vadd.f32 %v1494, %v1606
  %v1608 = vpop.f32.mrb[0].mxu0
  %v1609 = vadd.f32 %v1496, %v1608
  %v1610 = vpop.f32.mrb[0].mxu0
  %v1611 = vadd.f32 %v1498, %v1610
  %v1612 = vpop.f32.mrb[0].mxu0
  %v1613 = vadd.f32 %v1500, %v1612
  %1614 = vmatprep.mubr.bf16.mxu0 0
  %1615 = vmatmul.mubr.bf16.gmra.mrb[0].mxu0 %v502
  %v1616 = vpop.f32.mrb[0].mxu0
  %v1617 = vadd.f32 %v1504, %v1616
  %v1618 = vpop.f32.mrb[0].mxu0
  %v1619 = vadd.f32 %v1506, %v1618
  %v1620 = vpop.f32.mrb[0].mxu0
  %v1621 = vadd.f32 %v1508, %v1620
  %v1622 = vpop.f32.mrb[0].mxu0
  %v1623 = vadd.f32 %v1510, %v1622
  %1624 = vmatprep.mubr.bf16.mxu0 0
  %1625 = vmatmul.mubr.bf16.gmra.mrb[0].mxu0 %v505
  %v1626 = vpop.f32.mrb[0].mxu0
  %v1627 = vadd.f32 %v1514, %v1626
  %v1628 = vpop.f32.mrb[0].mxu0
  %v1629 = vadd.f32 %v1516, %v1628
  %v1630 = vpop.f32.mrb[0].mxu0
  %v1631 = vadd.f32 %v1518, %v1630
  %v1632 = vpop.f32.mrb[0].mxu0
  %v1633 = vadd.f32 %v1520, %v1632
  %1634 = vmatprep.mubr.bf16.mxu0 0
  %1635 = vmatmul.mubr.bf16.gmra.mrb[0].mxu0 %v508
  %v1636 = vpop.f32.mrb[0].mxu0
  %v1637 = vadd.f32 %v1524, %v1636
  %v1638 = vpop.f32.mrb[0].mxu0
  %v1639 = vadd.f32 %v1526, %v1638
  %v1640 = vpop.f32.mrb[0].mxu0
  %v1641 = vadd.f32 %v1528, %v1640
  %v1642 = vpop.f32.mrb[0].mxu0
  %v1643 = vadd.f32 %v1530, %v1642
  %1644 = vmatprep.mubr.bf16.mxu0 0
  %1645 = vmatmul.mubr.bf16.gmra.mrb[0].mxu0 %v511
  %v1646 = vpop.f32.mrb[0].mxu0
  %v1647 = vadd.f32 %v1534, %v1646
  %v1648 = vpop.f32.mrb[0].mxu0
  %v1649 = vadd.f32 %v1536, %v1648
  %v1650 = vpop.f32.mrb[0].mxu0
  %v1651 = vadd.f32 %v1538, %v1650
  %v1652 = vpop.f32.mrb[0].mxu0
  %v1653 = vadd.f32 %v1540, %v1652
  %1654 = vmatprep.mubr.bf16.mxu0 0
  %1655 = vmatmul.mubr.bf16.gmra.mrb[0].mxu0 %v514
  %v1656 = vpop.f32.mrb[0].mxu0
  %v1657 = vadd.f32 %v1544, %v1656
  %v1658 = vpop.f32.mrb[0].mxu0
  %v1659 = vadd.f32 %v1546, %v1658
  %v1660 = vpop.f32.mrb[0].mxu0
  %v1661 = vadd.f32 %v1548, %v1660
  %v1662 = vpop.f32.mrb[0].mxu0
  %v1663 = vadd.f32 %v1550, %v1662
  %1664 = vmatprep.mubr.bf16.mxu0 0
  %1665 = vmatmul.mubr.bf16.gmra.mrb[0].mxu0 %v517
  %v1666 = vpop.f32.mrb[0].mxu0
  %v1667 = vadd.f32 %v1554, %v1666
  %v1668 = vpop.f32.mrb[0].mxu0
  %v1669 = vadd.f32 %v1556, %v1668
  %v1670 = vpop.f32.mrb[0].mxu0
  %v1671 = vadd.f32 %v1558, %v1670
  %v1672 = vpop.f32.mrb[0].mxu0
  %v1673 = vadd.f32 %v1560, %v1672
  %1674 = vmatprep.mubr.bf16.mxu0 0
  %1675 = vmatmul.mubr.bf16.gmra.mrb[0].mxu0 %v520
  %v1676 = vpop.f32.mrb[0].mxu0
  %v1677 = vadd.f32 %v1564, %v1676
  %v1678 = vpop.f32.mrb[0].mxu0
  %v1679 = vadd.f32 %v1566, %v1678
  %v1680 = vpop.f32.mrb[0].mxu0
  %v1681 = vadd.f32 %v1568, %v1680
  %v1682 = vpop.f32.mrb[0].mxu0
  %v1683 = vadd.f32 %v1570, %v1682
  %1684 = vdwg.mxu0
  %1685 = vmatprep.subr.bf16.mxu0 0
  %1686 = vmatpush1.bf16.msra.mxu0 %v1108
  %1687 = vmatprep.subr.bf16.mxu0 0
  %1688 = vmatpush1.bf16.msra.mxu0 %v1111
  %1689 = vmatprep.subr.bf16.mxu0 0
  %1690 = vmatpush1.bf16.msra.mxu0 %v1114
  %1691 = vmatprep.subr.bf16.mxu0 0
  %1692 = vmatpush1.bf16.msra.mxu0 %v1117
  %1693 = vmatprep.subr.bf16.mxu0 0
  %1694 = vmatpush1.bf16.msra.mxu0 %v1120
  %1695 = vmatprep.subr.bf16.mxu0 0
  %1696 = vmatpush1.bf16.msra.mxu0 %v1123
  %1697 = vmatprep.subr.bf16.mxu0 0
  %1698 = vmatpush1.bf16.msra.mxu0 %v1126
  %1699 = vmatprep.subr.bf16.mxu0 0
  %1700 = vmatpush1.bf16.msra.mxu0 %v1129
  %1701 = vmatprep.subr.bf16.mxu0 0
  %1702 = vmatpush1.bf16.msra.mxu0 %v1132
  %1703 = vmatprep.subr.bf16.mxu0 0
  %1704 = vmatpush1.bf16.msra.mxu0 %v1135
  %1705 = vmatprep.subr.bf16.mxu0 0
  %1706 = vmatpush1.bf16.msra.mxu0 %v1138
  %1707 = vmatprep.subr.bf16.mxu0 0
  %1708 = vmatpush1.bf16.msra.mxu0 %v1141
  %1709 = vmatprep.subr.bf16.mxu0 0
  %1710 = vmatpush1.bf16.msra.mxu0 %v1144
  %1711 = vmatprep.subr.bf16.mxu0 0
  %1712 = vmatpush1.bf16.msra.mxu0 %v1147
  %1713 = vmatprep.subr.bf16.mxu0 0
  %1714 = vmatpush1.bf16.msra.mxu0 %v1150
  %1715 = vmatprep.subr.bf16.mxu0 0
  %1716 = vmatpush1.bf16.msra.mxu0 %v1153
  %1717 = vmatprep.mubr.bf16.mxu0 %v153
  %1718 = vmatmul.mubr.bf16.gmra.mrb[0].mxu0 %v101
  %v1719 = vpop.f32.mrb[0].mxu0
  %v1720 = vadd.f32 %v702, %v1719
  %v1721 = vpop.f32.mrb[0].mxu0
  %v1722 = vpop.f32.mrb[0].mxu0
  %v1723 = vadd.f32 %v702, %v1722
  %v1724 = vpop.f32.mrb[0].mxu0
  %1725 = vmatprep.mubr.bf16.mxu0 %v165
  %1726 = vmatmul.mubr.bf16.gmra.mrb[0].mxu0 %v102
  %v1727 = vpop.f32.mrb[0].mxu0
  %v1728 = vadd.f32 %v702, %v1727
  %v1729 = vpop.f32.mrb[0].mxu0
  %v1730 = vpop.f32.mrb[0].mxu0
  %v1731 = vadd.f32 %v702, %v1730
  %v1732 = vpop.f32.mrb[0].mxu0
  %1733 = vmatprep.mubr.bf16.mxu0 %v177
  %1734 = vmatmul.mubr.bf16.gmra.mrb[0].mxu0 %v103
  %v1735 = vpop.f32.mrb[0].mxu0
  %v1736 = vadd.f32 %v702, %v1735
  %v1737 = vpop.f32.mrb[0].mxu0
  %v1738 = vpop.f32.mrb[0].mxu0
  %v1739 = vadd.f32 %v702, %v1738
  %v1740 = vpop.f32.mrb[0].mxu0
  %1741 = vmatprep.mubr.bf16.mxu0 %v189
  %1742 = vmatmul.mubr.bf16.gmra.mrb[0].mxu0 %v104
  %v1743 = vpop.f32.mrb[0].mxu0
  %v1744 = vadd.f32 %v702, %v1743
  %v1745 = vpop.f32.mrb[0].mxu0
  %v1746 = vpop.f32.mrb[0].mxu0
  %v1747 = vadd.f32 %v702, %v1746
  %v1748 = vpop.f32.mrb[0].mxu0
  %1749 = vmatprep.mubr.bf16.mxu0 %v201
  %1750 = vmatmul.mubr.bf16.gmra.mrb[0].mxu0 %v105
  %v1751 = vpop.f32.mrb[0].mxu0
  %v1752 = vadd.f32 %v702, %v1751
  %v1753 = vpop.f32.mrb[0].mxu0
  %v1754 = vpop.f32.mrb[0].mxu0
  %v1755 = vadd.f32 %v702, %v1754
  %v1756 = vpop.f32.mrb[0].mxu0
  %1757 = vmatprep.mubr.bf16.mxu0 %v213
  %1758 = vmatmul.mubr.bf16.gmra.mrb[0].mxu0 %v106
  %v1759 = vpop.f32.mrb[0].mxu0
  %v1760 = vadd.f32 %v702, %v1759
  %v1761 = vpop.f32.mrb[0].mxu0
  %v1762 = vpop.f32.mrb[0].mxu0
  %v1763 = vadd.f32 %v702, %v1762
  %v1764 = vpop.f32.mrb[0].mxu0
  %1765 = vmatprep.mubr.bf16.mxu0 %v225
  %1766 = vmatmul.mubr.bf16.gmra.mrb[0].mxu0 %v107
  %v1767 = vpop.f32.mrb[0].mxu0
  %v1768 = vadd.f32 %v702, %v1767
  %v1769 = vpop.f32.mrb[0].mxu0
  %v1770 = vpop.f32.mrb[0].mxu0
  %v1771 = vadd.f32 %v702, %v1770
  %v1772 = vpop.f32.mrb[0].mxu0
  %1773 = vmatprep.mubr.bf16.mxu0 %v237
  %1774 = vmatmul.mubr.bf16.gmra.mrb[0].mxu0 %v108
  %v1775 = vpop.f32.mrb[0].mxu0
  %v1776 = vadd.f32 %v702, %v1775
  %v1777 = vpop.f32.mrb[0].mxu0
  %v1778 = vpop.f32.mrb[0].mxu0
  %v1779 = vadd.f32 %v702, %v1778
  %v1780 = vpop.f32.mrb[0].mxu0
  %1781 = vdwg.mxu0
  %1782 = vmatprep.subr.bf16.mxu0 0
  %1783 = vmatpush1.bf16.msra.mxu0 %v1156
  %1784 = vmatprep.subr.bf16.mxu0 0
  %1785 = vmatpush1.bf16.msra.mxu0 %v1159
  %1786 = vmatprep.subr.bf16.mxu0 0
  %1787 = vmatpush1.bf16.msra.mxu0 %v1162
  %1788 = vmatprep.subr.bf16.mxu0 0
  %1789 = vmatpush1.bf16.msra.mxu0 %v1165
  %1790 = vmatprep.subr.bf16.mxu0 0
  %1791 = vmatpush1.bf16.msra.mxu0 %v1168
  %1792 = vmatprep.subr.bf16.mxu0 0
  %1793 = vmatpush1.bf16.msra.mxu0 %v1171
  %1794 = vmatprep.subr.bf16.mxu0 0
  %1795 = vmatpush1.bf16.msra.mxu0 %v1174
  %1796 = vmatprep.subr.bf16.mxu0 0
  %1797 = vmatpush1.bf16.msra.mxu0 %v1177
  %1798 = vmatprep.subr.bf16.mxu0 0
  %1799 = vmatpush1.bf16.msra.mxu0 %v1180
  %1800 = vmatprep.subr.bf16.mxu0 0
  %1801 = vmatpush1.bf16.msra.mxu0 %v1183
  %1802 = vmatprep.subr.bf16.mxu0 0
  %1803 = vmatpush1.bf16.msra.mxu0 %v1186
  %1804 = vmatprep.subr.bf16.mxu0 0
  %1805 = vmatpush1.bf16.msra.mxu0 %v1189
  %1806 = vmatprep.subr.bf16.mxu0 0
  %1807 = vmatpush1.bf16.msra.mxu0 %v1192
  %1808 = vmatprep.subr.bf16.mxu0 0
  %1809 = vmatpush1.bf16.msra.mxu0 %v1195
  %1810 = vmatprep.subr.bf16.mxu0 0
  %1811 = vmatpush1.bf16.msra.mxu0 %v1198
  %1812 = vmatprep.subr.bf16.mxu0 0
  %1813 = vmatpush1.bf16.msra.mxu0 %v1201
  %1814 = vmatprep.mubr.bf16.mxu0 %v344
  %1815 = vmatmul.mubr.bf16.gmra.mrb[0].mxu0 %v273
  %v1816 = vpop.f32.mrb[0].mxu0
  %v1817 = vadd.f32 %v1720, %v1816
  %v1818 = vpop.f32.mrb[0].mxu0
  %v1819 = vpop.f32.mrb[0].mxu0
  %v1820 = vadd.f32 %v1723, %v1819
  %v1821 = vpop.f32.mrb[0].mxu0
  %1822 = vmatprep.mubr.bf16.mxu0 %v361
  %1823 = vmatmul.mubr.bf16.gmra.mrb[0].mxu0 %v276
  %v1824 = vpop.f32.mrb[0].mxu0
  %v1825 = vadd.f32 %v1728, %v1824
  %v1826 = vpop.f32.mrb[0].mxu0
  %v1827 = vpop.f32.mrb[0].mxu0
  %v1828 = vadd.f32 %v1731, %v1827
  %v1829 = vpop.f32.mrb[0].mxu0
  %1830 = vmatprep.mubr.bf16.mxu0 %v378
  %1831 = vmatmul.mubr.bf16.gmra.mrb[0].mxu0 %v279
  %v1832 = vpop.f32.mrb[0].mxu0
  %v1833 = vadd.f32 %v1736, %v1832
  %v1834 = vpop.f32.mrb[0].mxu0
  %v1835 = vpop.f32.mrb[0].mxu0
  %v1836 = vadd.f32 %v1739, %v1835
  %v1837 = vpop.f32.mrb[0].mxu0
  %1838 = vmatprep.mubr.bf16.mxu0 %v395
  %1839 = vmatmul.mubr.bf16.gmra.mrb[0].mxu0 %v282
  %v1840 = vpop.f32.mrb[0].mxu0
  %v1841 = vadd.f32 %v1744, %v1840
  %v1842 = vpop.f32.mrb[0].mxu0
  %v1843 = vpop.f32.mrb[0].mxu0
  %v1844 = vadd.f32 %v1747, %v1843
  %v1845 = vpop.f32.mrb[0].mxu0
  %1846 = vmatprep.mubr.bf16.mxu0 %v412
  %1847 = vmatmul.mubr.bf16.gmra.mrb[0].mxu0 %v285
  %v1848 = vpop.f32.mrb[0].mxu0
  %v1849 = vadd.f32 %v1752, %v1848
  %v1850 = vpop.f32.mrb[0].mxu0
  %v1851 = vpop.f32.mrb[0].mxu0
  %v1852 = vadd.f32 %v1755, %v1851
  %v1853 = vpop.f32.mrb[0].mxu0
  %1854 = vmatprep.mubr.bf16.mxu0 %v429
  %1855 = vmatmul.mubr.bf16.gmra.mrb[0].mxu0 %v288
  %v1856 = vpop.f32.mrb[0].mxu0
  %v1857 = vadd.f32 %v1760, %v1856
  %v1858 = vpop.f32.mrb[0].mxu0
  %v1859 = vpop.f32.mrb[0].mxu0
  %v1860 = vadd.f32 %v1763, %v1859
  %v1861 = vpop.f32.mrb[0].mxu0
  %1862 = vmatprep.mubr.bf16.mxu0 %v446
  %1863 = vmatmul.mubr.bf16.gmra.mrb[0].mxu0 %v291
  %v1864 = vpop.f32.mrb[0].mxu0
  %v1865 = vadd.f32 %v1768, %v1864
  %v1866 = vpop.f32.mrb[0].mxu0
  %v1867 = vpop.f32.mrb[0].mxu0
  %v1868 = vadd.f32 %v1771, %v1867
  %v1869 = vpop.f32.mrb[0].mxu0
  %1870 = vmatprep.mubr.bf16.mxu0 %v463
  %1871 = vmatmul.mubr.bf16.gmra.mrb[0].mxu0 %v294
  %v1872 = vpop.f32.mrb[0].mxu0
  %v1873 = vadd.f32 %v1776, %v1872
  %v1874 = vpop.f32.mrb[0].mxu0
  %v1875 = vpop.f32.mrb[0].mxu0
  %v1876 = vadd.f32 %v1779, %v1875
  %v1877 = vpop.f32.mrb[0].mxu0
  %1878 = vdwg.mxu0
  %1879 = vmatprep.subr.bf16.mxu0 0
  %1880 = vmatpush1.bf16.msra.mxu0 %v1204
  %1881 = vmatprep.subr.bf16.mxu0 0
  %1882 = vmatpush1.bf16.msra.mxu0 %v1207
  %1883 = vmatprep.subr.bf16.mxu0 0
  %1884 = vmatpush1.bf16.msra.mxu0 %v1210
  %1885 = vmatprep.subr.bf16.mxu0 0
  %1886 = vmatpush1.bf16.msra.mxu0 %v1213
  %1887 = vmatprep.subr.bf16.mxu0 0
  %1888 = vmatpush1.bf16.msra.mxu0 %v1216
  %1889 = vmatprep.subr.bf16.mxu0 0
  %1890 = vmatpush1.bf16.msra.mxu0 %v1219
  %1891 = vmatprep.subr.bf16.mxu0 0
  %1892 = vmatpush1.bf16.msra.mxu0 %v1222
  %1893 = vmatprep.subr.bf16.mxu0 0
  %1894 = vmatpush1.bf16.msra.mxu0 %v1225
  %1895 = vmatprep.subr.bf16.mxu0 0
  %1896 = vmatpush1.bf16.msra.mxu0 0
  %1897 = vmatprep.subr.bf16.mxu0 0
  %1898 = vmatpush1.bf16.msra.mxu0 0
  %1899 = vmatprep.subr.bf16.mxu0 0
  %1900 = vmatpush1.bf16.msra.mxu0 0
  %1901 = vmatprep.subr.bf16.mxu0 0
  %1902 = vmatpush1.bf16.msra.mxu0 0
  %1903 = vmatprep.subr.bf16.mxu0 0
  %1904 = vmatpush1.bf16.msra.mxu0 0
  %1905 = vmatprep.subr.bf16.mxu0 0
  %1906 = vmatpush1.bf16.msra.mxu0 0
  %1907 = vmatprep.subr.bf16.mxu0 0
  %1908 = vmatpush1.bf16.msra.mxu0 0
  %1909 = vmatprep.subr.bf16.mxu0 0
  %1910 = vmatpush1.bf16.msra.mxu0 0
  %1911 = vmatprep.mubr.bf16.mxu0 0
  %1912 = vmatmul.mubr.bf16.gmra.mrb[0].mxu0 %v499
  %v1913 = vpop.f32.mrb[0].mxu0
  %v1914 = vadd.f32 %v1817, %v1913
  %v1915 = vpop.f32.mrb[0].mxu0
  %v1916 = vpop.f32.mrb[0].mxu0
  %v1917 = vadd.f32 %v1820, %v1916
  %v1918 = vpop.f32.mrb[0].mxu0
  %1919 = vmatprep.mubr.bf16.mxu0 0
  %1920 = vmatmul.mubr.bf16.gmra.mrb[0].mxu0 %v502
  %v1921 = vpop.f32.mrb[0].mxu0
  %v1922 = vadd.f32 %v1825, %v1921
  %v1923 = vpop.f32.mrb[0].mxu0
  %v1924 = vpop.f32.mrb[0].mxu0
  %v1925 = vadd.f32 %v1828, %v1924
  %v1926 = vpop.f32.mrb[0].mxu0
  %1927 = vmatprep.mubr.bf16.mxu0 0
  %1928 = vmatmul.mubr.bf16.gmra.mrb[0].mxu0 %v505
  %v1929 = vpop.f32.mrb[0].mxu0
  %v1930 = vadd.f32 %v1833, %v1929
  %v1931 = vpop.f32.mrb[0].mxu0
  %v1932 = vpop.f32.mrb[0].mxu0
  %v1933 = vadd.f32 %v1836, %v1932
  %v1934 = vpop.f32.mrb[0].mxu0
  %1935 = vmatprep.mubr.bf16.mxu0 0
  %1936 = vmatmul.mubr.bf16.gmra.mrb[0].mxu0 %v508
  %v1937 = vpop.f32.mrb[0].mxu0
  %v1938 = vadd.f32 %v1841, %v1937
  %v1939 = vpop.f32.mrb[0].mxu0
  %v1940 = vpop.f32.mrb[0].mxu0
  %v1941 = vadd.f32 %v1844, %v1940
  %v1942 = vpop.f32.mrb[0].mxu0
  %1943 = vmatprep.mubr.bf16.mxu0 0
  %1944 = vmatmul.mubr.bf16.gmra.mrb[0].mxu0 %v511
  %v1945 = vpop.f32.mrb[0].mxu0
  %v1946 = vadd.f32 %v1849, %v1945
  %v1947 = vpop.f32.mrb[0].mxu0
  %v1948 = vpop.f32.mrb[0].mxu0
  %v1949 = vadd.f32 %v1852, %v1948
  %v1950 = vpop.f32.mrb[0].mxu0
  %1951 = vmatprep.mubr.bf16.mxu0 0
  %1952 = vmatmul.mubr.bf16.gmra.mrb[0].mxu0 %v514
  %v1953 = vpop.f32.mrb[0].mxu0
  %v1954 = vadd.f32 %v1857, %v1953
  %v1955 = vpop.f32.mrb[0].mxu0
  %v1956 = vpop.f32.mrb[0].mxu0
  %v1957 = vadd.f32 %v1860, %v1956
  %v1958 = vpop.f32.mrb[0].mxu0
  %1959 = vmatprep.mubr.bf16.mxu0 0
  %1960 = vmatmul.mubr.bf16.gmra.mrb[0].mxu0 %v517
  %v1961 = vpop.f32.mrb[0].mxu0
  %v1962 = vadd.f32 %v1865, %v1961
  %v1963 = vpop.f32.mrb[0].mxu0
  %v1964 = vpop.f32.mrb[0].mxu0
  %v1965 = vadd.f32 %v1868, %v1964
  %v1966 = vpop.f32.mrb[0].mxu0
  %1967 = vmatprep.mubr.bf16.mxu0 0
  %1968 = vmatmul.mubr.bf16.gmra.mrb[0].mxu0 %v520
  %v1969 = vpop.f32.mrb[0].mxu0
  %v1970 = vadd.f32 %v1873, %v1969
  %v1971 = vpop.f32.mrb[0].mxu0
  %v1972 = vpop.f32.mrb[0].mxu0
  %v1973 = vadd.f32 %v1876, %v1972
  %v1974 = vpop.f32.mrb[0].mxu0
  %1975 = vdwg.mxu0
  %v1976 = vmax.f32 %v1607, 0.0
  %v1977 = vmax.f32 %v1609, 0.0
  %v1978 = vmax.f32 %v1914, 0.0
  %v1979 = vmax.f32 %v1611, 0.0
  %v1980 = vmax.f32 %v1613, 0.0
  %v1981 = vmax.f32 %v1917, 0.0
  %v1982 = vmax.f32 %v1617, 0.0
  %v1983 = vmax.f32 %v1619, 0.0
  %v1984 = vmax.f32 %v1922, 0.0
  %v1985 = vmax.f32 %v1621, 0.0
  %v1986 = vmax.f32 %v1623, 0.0
  %v1987 = vmax.f32 %v1925, 0.0
  %v1988 = vmax.f32 %v1627, 0.0
  %v1989 = vmax.f32 %v1629, 0.0
  %v1990 = vmax.f32 %v1930, 0.0
  %v1991 = vmax.f32 %v1631, 0.0
  %v1992 = vmax.f32 %v1633, 0.0
  %v1993 = vmax.f32 %v1933, 0.0
  %v1994 = vmax.f32 %v1637, 0.0
  %v1995 = vmax.f32 %v1639, 0.0
  %v1996 = vmax.f32 %v1938, 0.0
  %v1997 = vmax.f32 %v1641, 0.0
  %v1998 = vmax.f32 %v1643, 0.0
  %v1999 = vmax.f32 %v1941, 0.0
  %v2000 = vmax.f32 %v1647, 0.0
  %v2001 = vmax.f32 %v1649, 0.0
  %v2002 = vmax.f32 %v1946, 0.0
  %v2003 = vmax.f32 %v1651, 0.0
  %v2004 = vmax.f32 %v1653, 0.0
  %v2005 = vmax.f32 %v1949, 0.0
  %v2006 = vmax.f32 %v1657, 0.0
  %v2007 = vmax.f32 %v1659, 0.0
  %v2008 = vmax.f32 %v1954, 0.0
  %v2009 = vmax.f32 %v1661, 0.0
  %v2010 = vmax.f32 %v1663, 0.0
  %v2011 = vmax.f32 %v1957, 0.0
  %v2012 = vmax.f32 %v1667, 0.0
  %v2013 = vmax.f32 %v1669, 0.0
  %v2014 = vmax.f32 %v1962, 0.0
  %v2015 = vmax.f32 %v1671, 0.0
  %v2016 = vmax.f32 %v1673, 0.0
  %v2017 = vmax.f32 %v1965, 0.0
  %v2018 = vmax.f32 %v1677, 0.0
  %v2019 = vmax.f32 %v1679, 0.0
  %v2020 = vmax.f32 %v1970, 0.0
  %v2021 = vmax.f32 %v1681, 0.0
  %v2022 = vmax.f32 %v1683, 0.0
  %v2023 = vmax.f32 %v1973, 0.0
  %v2024 = vlaneseq
  %v2025 = vshrl.u32 %v2024, 7
  %v2026 = vadd.s32 %v2025, 8
  %v2027 = vlaneseq
  %v2028 = vand.u32 %v2027, 127
  %v2029 = vadd.s32 %v2028, 128
  %v2030 = vadd.s32 %v2028, 256
  %vm2031 = vcmp.lt.s32.totalorder %v2028, 128
  %vm2032 = vcmp.lt.s32.totalorder %v2029, 128
  %vm2033 = vcmp.lt.s32.totalorder %v2030, 128
  %vm2034 = vcmp.lt.s32.totalorder %v2028, 256
  %vm2035 = vcmp.lt.s32.totalorder %v2029, 256
  %vm2036 = vcmp.lt.s32.totalorder %v2030, 256
  %v2037 = vsel %vm2034, 13, 12
  %v2038 = vsel %vm2035, 13, 12
  %v2039 = vsel %vm2036, 13, 12
  %v2040 = vsel %vm2031, 14, %v2037
  %v2041 = vsel %vm2032, 14, %v2038
  %v2042 = vsel %vm2033, 14, %v2039
  %vm2043 = vcmp.lt.s32.totalorder %v2025, %v2040
  %vm2044 = vcmp.lt.s32.totalorder %v2025, %v2041
  %vm2045 = vcmp.lt.s32.totalorder %v2025, %v2042
  %vm2046 = vcmp.lt.s32.totalorder %v2026, %v2040
  %vm2047 = vcmp.lt.s32.totalorder %v2026, %v2041
  %vm2048 = vcmp.lt.s32.totalorder %v2026, %v2042
  %v2049 = vsel %vm2043, 1, 0
  %v2050 = vsel %vm2044, 1, 0
  %v2051 = vsel %vm2045, 1, 0
  %v2052 = vsel %vm2046, 1, 0
  %v2053 = vsel %vm2047, 1, 0
  %v2054 = vsel %vm2048, 1, 0
  %vm2055 = vcmp.eq.s32.totalorder %v2049, 1
  %vm2056 = vcmp.eq.s32.totalorder %v2050, 1
  %vm2057 = vcmp.eq.s32.totalorder %v2051, 1
  %vm2058 = vcmp.eq.s32.totalorder %v2052, 1
  %vm2059 = vcmp.eq.s32.totalorder %v2053, 1
  %vm2060 = vcmp.eq.s32.totalorder %v2054, 1
  %v2061 = vsel %vm2055, %v1976, 0.0
  %v2062 = vsel %vm2056, %v1977, 0.0
  %v2063 = vsel %vm2057, %v1978, 0.0
  %v2064 = vsel %vm2058, %v1979, 0.0
  %v2065 = vsel %vm2059, %v1980, 0.0
  %v2066 = vsel %vm2060, %v1981, 0.0
  %v2067 = vsel %vm2055, %v1982, 0.0
  %v2068 = vsel %vm2056, %v1983, 0.0
  %v2069 = vsel %vm2057, %v1984, 0.0
  %v2070 = vsel %vm2058, %v1985, 0.0
  %v2071 = vsel %vm2059, %v1986, 0.0
  %v2072 = vsel %vm2060, %v1987, 0.0
  %v2073 = vsel %vm2055, %v1988, 0.0
  %v2074 = vsel %vm2056, %v1989, 0.0
  %v2075 = vsel %vm2057, %v1990, 0.0
  %v2076 = vsel %vm2058, %v1991, 0.0
  %v2077 = vsel %vm2059, %v1992, 0.0
  %v2078 = vsel %vm2060, %v1993, 0.0
  %v2079 = vsel %vm2055, %v1994, 0.0
  %v2080 = vsel %vm2056, %v1995, 0.0
  %v2081 = vsel %vm2057, %v1996, 0.0
  %v2082 = vsel %vm2058, %v1997, 0.0
  %v2083 = vsel %vm2059, %v1998, 0.0
  %v2084 = vsel %vm2060, %v1999, 0.0
  %v2085 = vsel %vm2055, %v2000, 0.0
  %v2086 = vsel %vm2056, %v2001, 0.0
  %v2087 = vsel %vm2057, %v2002, 0.0
  %v2088 = vsel %vm2058, %v2003, 0.0
  %v2089 = vsel %vm2059, %v2004, 0.0
  %v2090 = vsel %vm2060, %v2005, 0.0
  %v2091 = vsel %vm2055, %v2006, 0.0
  %v2092 = vsel %vm2056, %v2007, 0.0
  %v2093 = vsel %vm2057, %v2008, 0.0
  %v2094 = vsel %vm2058, %v2009, 0.0
  %v2095 = vsel %vm2059, %v2010, 0.0
  %v2096 = vsel %vm2060, %v2011, 0.0
  %v2097 = vsel %vm2055, %v2012, 0.0
  %v2098 = vsel %vm2056, %v2013, 0.0
  %v2099 = vsel %vm2057, %v2014, 0.0
  %v2100 = vsel %vm2058, %v2015, 0.0
  %v2101 = vsel %vm2059, %v2016, 0.0
  %v2102 = vsel %vm2060, %v2017, 0.0
  %v2103 = vsel %vm2055, %v2018, 0.0
  %v2104 = vsel %vm2056, %v2019, 0.0
  %v2105 = vsel %vm2057, %v2020, 0.0
  %v2106 = vsel %vm2058, %v2021, 0.0
  %v2107 = vsel %vm2059, %v2022, 0.0
  %v2108 = vsel %vm2060, %v2023, 0.0
  %v2109 = vmax.f32 %v2061, %v2064
  %v2110 = vrot.slane %v2109, 4
  %v2111 = vmax.f32 %v2109, %v2110
  %v2112 = vrot.slane %v2111, 2
  %v2113 = vmax.f32 %v2111, %v2112
  %v2114 = vrot.slane %v2113, 1
  %v2115 = vmax.f32 %v2113, %v2114
  %v2116 = vmax.f32 %v2062, %v2065
  %v2117 = vrot.slane %v2116, 4
  %v2118 = vmax.f32 %v2116, %v2117
  %v2119 = vrot.slane %v2118, 2
  %v2120 = vmax.f32 %v2118, %v2119
  %v2121 = vrot.slane %v2120, 1
  %v2122 = vmax.f32 %v2120, %v2121
  %v2123 = vmax.f32 %v2063, %v2066
  %v2124 = vrot.slane %v2123, 4
  %v2125 = vmax.f32 %v2123, %v2124
  %v2126 = vrot.slane %v2125, 2
  %v2127 = vmax.f32 %v2125, %v2126
  %v2128 = vrot.slane %v2127, 1
  %v2129 = vmax.f32 %v2127, %v2128
  %v2130 = vmax.f32 %v2067, %v2070
  %v2131 = vrot.slane %v2130, 4
  %v2132 = vmax.f32 %v2130, %v2131
  %v2133 = vrot.slane %v2132, 2
  %v2134 = vmax.f32 %v2132, %v2133
  %v2135 = vrot.slane %v2134, 1
  %v2136 = vmax.f32 %v2134, %v2135
  %v2137 = vmax.f32 %v2068, %v2071
  %v2138 = vrot.slane %v2137, 4
  %v2139 = vmax.f32 %v2137, %v2138
  %v2140 = vrot.slane %v2139, 2
  %v2141 = vmax.f32 %v2139, %v2140
  %v2142 = vrot.slane %v2141, 1
  %v2143 = vmax.f32 %v2141, %v2142
  %v2144 = vmax.f32 %v2069, %v2072
  %v2145 = vrot.slane %v2144, 4
  %v2146 = vmax.f32 %v2144, %v2145
  %v2147 = vrot.slane %v2146, 2
  %v2148 = vmax.f32 %v2146, %v2147
  %v2149 = vrot.slane %v2148, 1
  %v2150 = vmax.f32 %v2148, %v2149
  %v2151 = vmax.f32 %v2073, %v2076
  %v2152 = vrot.slane %v2151, 4
  %v2153 = vmax.f32 %v2151, %v2152
  %v2154 = vrot.slane %v2153, 2
  %v2155 = vmax.f32 %v2153, %v2154
  %v2156 = vrot.slane %v2155, 1
  %v2157 = vmax.f32 %v2155, %v2156
  %v2158 = vmax.f32 %v2074, %v2077
  %v2159 = vrot.slane %v2158, 4
  %v2160 = vmax.f32 %v2158, %v2159
  %v2161 = vrot.slane %v2160, 2
  %v2162 = vmax.f32 %v2160, %v2161
  %v2163 = vrot.slane %v2162, 1
  %v2164 = vmax.f32 %v2162, %v2163
  %v2165 = vmax.f32 %v2075, %v2078
  %v2166 = vrot.slane %v2165, 4
  %v2167 = vmax.f32 %v2165, %v2166
  %v2168 = vrot.slane %v2167, 2
  %v2169 = vmax.f32 %v2167, %v2168
  %v2170 = vrot.slane %v2169, 1
  %v2171 = vmax.f32 %v2169, %v2170
  %v2172 = vmax.f32 %v2079, %v2082
  %v2173 = vrot.slane %v2172, 4
  %v2174 = vmax.f32 %v2172, %v2173
  %v2175 = vrot.slane %v2174, 2
  %v2176 = vmax.f32 %v2174, %v2175
  %v2177 = vrot.slane %v2176, 1
  %v2178 = vmax.f32 %v2176, %v2177
  %v2179 = vmax.f32 %v2080, %v2083
  %v2180 = vrot.slane %v2179, 4
  %v2181 = vmax.f32 %v2179, %v2180
  %v2182 = vrot.slane %v2181, 2
  %v2183 = vmax.f32 %v2181, %v2182
  %v2184 = vrot.slane %v2183, 1
  %v2185 = vmax.f32 %v2183, %v2184
  %v2186 = vmax.f32 %v2081, %v2084
  %v2187 = vrot.slane %v2186, 4
  %v2188 = vmax.f32 %v2186, %v2187
  %v2189 = vrot.slane %v2188, 2
  %v2190 = vmax.f32 %v2188, %v2189
  %v2191 = vrot.slane %v2190, 1
  %v2192 = vmax.f32 %v2190, %v2191
  %v2193 = vmax.f32 %v2085, %v2088
  %v2194 = vrot.slane %v2193, 4
  %v2195 = vmax.f32 %v2193, %v2194
  %v2196 = vrot.slane %v2195, 2
  %v2197 = vmax.f32 %v2195, %v2196
  %v2198 = vrot.slane %v2197, 1
  %v2199 = vmax.f32 %v2197, %v2198
  %v2200 = vmax.f32 %v2086, %v2089
  %v2201 = vrot.slane %v2200, 4
  %v2202 = vmax.f32 %v2200, %v2201
  %v2203 = vrot.slane %v2202, 2
  %v2204 = vmax.f32 %v2202, %v2203
  %v2205 = vrot.slane %v2204, 1
  %v2206 = vmax.f32 %v2204, %v2205
  %v2207 = vmax.f32 %v2087, %v2090
  %v2208 = vrot.slane %v2207, 4
  %v2209 = vmax.f32 %v2207, %v2208
  %v2210 = vrot.slane %v2209, 2
  %v2211 = vmax.f32 %v2209, %v2210
  %v2212 = vrot.slane %v2211, 1
  %v2213 = vmax.f32 %v2211, %v2212
  %v2214 = vmax.f32 %v2091, %v2094
  %v2215 = vrot.slane %v2214, 4
  %v2216 = vmax.f32 %v2214, %v2215
  %v2217 = vrot.slane %v2216, 2
  %v2218 = vmax.f32 %v2216, %v2217
  %v2219 = vrot.slane %v2218, 1
  %v2220 = vmax.f32 %v2218, %v2219
  %v2221 = vmax.f32 %v2092, %v2095
  %v2222 = vrot.slane %v2221, 4
  %v2223 = vmax.f32 %v2221, %v2222
  %v2224 = vrot.slane %v2223, 2
  %v2225 = vmax.f32 %v2223, %v2224
  %v2226 = vrot.slane %v2225, 1
  %v2227 = vmax.f32 %v2225, %v2226
  %v2228 = vmax.f32 %v2093, %v2096
  %v2229 = vrot.slane %v2228, 4
  %v2230 = vmax.f32 %v2228, %v2229
  %v2231 = vrot.slane %v2230, 2
  %v2232 = vmax.f32 %v2230, %v2231
  %v2233 = vrot.slane %v2232, 1
  %v2234 = vmax.f32 %v2232, %v2233
  %v2235 = vmax.f32 %v2097, %v2100
  %v2236 = vrot.slane %v2235, 4
  %v2237 = vmax.f32 %v2235, %v2236
  %v2238 = vrot.slane %v2237, 2
  %v2239 = vmax.f32 %v2237, %v2238
  %v2240 = vrot.slane %v2239, 1
  %v2241 = vmax.f32 %v2239, %v2240
  %v2242 = vmax.f32 %v2098, %v2101
  %v2243 = vrot.slane %v2242, 4
  %v2244 = vmax.f32 %v2242, %v2243
  %v2245 = vrot.slane %v2244, 2
  %v2246 = vmax.f32 %v2244, %v2245
  %v2247 = vrot.slane %v2246, 1
  %v2248 = vmax.f32 %v2246, %v2247
  %v2249 = vmax.f32 %v2099, %v2102
  %v2250 = vrot.slane %v2249, 4
  %v2251 = vmax.f32 %v2249, %v2250
  %v2252 = vrot.slane %v2251, 2
  %v2253 = vmax.f32 %v2251, %v2252
  %v2254 = vrot.slane %v2253, 1
  %v2255 = vmax.f32 %v2253, %v2254
  %v2256 = vmax.f32 %v2103, %v2106
  %v2257 = vrot.slane %v2256, 4
  %v2258 = vmax.f32 %v2256, %v2257
  %v2259 = vrot.slane %v2258, 2
  %v2260 = vmax.f32 %v2258, %v2259
  %v2261 = vrot.slane %v2260, 1
  %v2262 = vmax.f32 %v2260, %v2261
  %v2263 = vmax.f32 %v2104, %v2107
  %v2264 = vrot.slane %v2263, 4
  %v2265 = vmax.f32 %v2263, %v2264
  %v2266 = vrot.slane %v2265, 2
  %v2267 = vmax.f32 %v2265, %v2266
  %v2268 = vrot.slane %v2267, 1
  %v2269 = vmax.f32 %v2267, %v2268
  %v2270 = vmax.f32 %v2105, %v2108
  %v2271 = vrot.slane %v2270, 4
  %v2272 = vmax.f32 %v2270, %v2271
  %v2273 = vrot.slane %v2272, 2
  %v2274 = vmax.f32 %v2272, %v2273
  %v2275 = vrot.slane %v2274, 1
  %v2276 = vmax.f32 %v2274, %v2275
  %v2277 = vld [vmem:[%s3] sm:$0xff]
  %v2278 = vld [vmem:[%s3 + $0x8] sm:$0xff]
  %v2279 = vld [vmem:[%s3 + $0x10] sm:$0xff]
  %v2280 = vld [vmem:[%s3 + $0x18] sm:$0xff]
  %v2281 = vld [vmem:[%s3 + $0x20] sm:$0xff]
  %v2282 = vld [vmem:[%s3 + $0x28] sm:$0xff]
  %v2283 = vld [vmem:[%s3 + $0x30] sm:$0xff]
  %v2284 = vld [vmem:[%s3 + $0x38] sm:$0xff]
  %v2285 = vld [vmem:[%s3 + $0x40] sm:$0xff]
  %v2286 = vld [vmem:[%s3 + $0x48] sm:$0xff]
  %v2287 = vld [vmem:[%s3 + $0x50] sm:$0xff]
  %v2288 = vld [vmem:[%s3 + $0x58] sm:$0xff]
  %v2289 = vld [vmem:[%s3 + $0x60] sm:$0xff]
  %v2290 = vld [vmem:[%s3 + $0x68] sm:$0xff]
  %v2291 = vld [vmem:[%s3 + $0x70] sm:$0xff]
  %v2292 = vld [vmem:[%s3 + $0x78] sm:$0xff]
  %v2293 = vld [vmem:[%s3 + $0x80] sm:$0xff]
  %v2294 = vld [vmem:[%s3 + $0x88] sm:$0xff]
  %v2295 = vld [vmem:[%s3 + $0x90] sm:$0xff]
  %v2296 = vld [vmem:[%s3 + $0x98] sm:$0xff]
  %v2297 = vld [vmem:[%s3 + $0xa0] sm:$0xff]
  %v2298 = vld [vmem:[%s3 + $0xa8] sm:$0xff]
  %v2299 = vld [vmem:[%s3 + $0xb0] sm:$0xff]
  %v2300 = vld [vmem:[%s3 + $0xb8] sm:$0xff]
  %v2301 = vld [vmem:[%s3 + $0xc0] sm:$0xff]
  %v2302 = vld [vmem:[%s3 + $0xc8] sm:$0xff]
  %v2303 = vld [vmem:[%s3 + $0xd0] sm:$0xff]
  %v2304 = vld [vmem:[%s3 + $0xd8] sm:$0xff]
  %v2305 = vld [vmem:[%s3 + $0xe0] sm:$0xff]
  %v2306 = vld [vmem:[%s3 + $0xe8] sm:$0xff]
  %v2307 = vld [vmem:[%s3 + $0xf0] sm:$0xff]
  %v2308 = vld [vmem:[%s3 + $0xf8] sm:$0xff]
  %v2309 = vld [vmem:[%s3 + $0x100] sm:$0xff]
  %v2310 = vld [vmem:[%s3 + $0x108] sm:$0xff]
  %v2311 = vld [vmem:[%s3 + $0x110] sm:$0xff]
  %v2312 = vld [vmem:[%s3 + $0x118] sm:$0xff]
  %v2313 = vld [vmem:[%s3 + $0x120] sm:$0xff]
  %v2314 = vld [vmem:[%s3 + $0x128] sm:$0xff]
  %v2315 = vld [vmem:[%s3 + $0x130] sm:$0xff]
  %v2316 = vld [vmem:[%s3 + $0x138] sm:$0xff]
  %v2317 = vld [vmem:[%s3 + $0x140] sm:$0xff]
  %v2318 = vld [vmem:[%s3 + $0x148] sm:$0xff]
  %v2319 = vld [vmem:[%s3 + $0x150] sm:$0xff]
  %v2320 = vld [vmem:[%s3 + $0x158] sm:$0xff]
  %v2321 = vld [vmem:[%s3 + $0x160] sm:$0xff]
  %v2322 = vld [vmem:[%s3 + $0x168] sm:$0xff]
  %v2323 = vld [vmem:[%s3 + $0x170] sm:$0xff]
  %v2324 = vld [vmem:[%s3 + $0x178] sm:$0xff]
  %v2325 = vld [vmem:[%s4] sm:$0x1]
  %v2327 = vlaneseq
  %v2328 = vshrl.u32 %v2327, 7
  %v2329 = vsub.s32 0, %v2328
  %v2330 = vrot.slane %v2325, %v2329
  %vm2356 = vcmask 1041409
  %v2357 = vsel %vm2356, %v2136, %v2115
  %vm2358 = vcmask 1042434
  %v2359 = vsel %vm2358, %v2157, %v2357
  %vm2360 = vcmask 1043459
  %v2361 = vsel %vm2360, %v2178, %v2359
  %vm2362 = vcmask 1044484
  %v2363 = vsel %vm2362, %v2199, %v2361
  %vm2364 = vcmask 1045509
  %v2365 = vsel %vm2364, %v2220, %v2363
  %vm2366 = vcmask 1046534
  %v2367 = vsel %vm2366, %v2241, %v2365
  %vm2368 = vcmask 1047559
  %v2369 = vsel %vm2368, %v2262, %v2367
  %v2370 = vsel %vm2356, %v2143, %v2122
  %v2371 = vsel %vm2358, %v2164, %v2370
  %v2372 = vsel %vm2360, %v2185, %v2371
  %v2373 = vsel %vm2362, %v2206, %v2372
  %v2374 = vsel %vm2364, %v2227, %v2373
  %v2375 = vsel %vm2366, %v2248, %v2374
  %v2376 = vsel %vm2368, %v2269, %v2375
  %v2377 = vsel %vm2356, %v2150, %v2129
  %v2378 = vsel %vm2358, %v2171, %v2377
  %v2379 = vsel %vm2360, %v2192, %v2378
  %v2380 = vsel %vm2362, %v2213, %v2379
  %v2381 = vsel %vm2364, %v2234, %v2380
  %v2382 = vsel %vm2366, %v2255, %v2381
  %v2383 = vsel %vm2368, %v2276, %v2382
  %2387 = vmatprep.subr.mxu0 0.0
  %2388 = vmatpush1.msra.mxu0 %v2277
  %2389 = vmatprep.subr.mxu0 0.0
  %2390 = vmatpush1.msra.mxu0 %v2278
  %2391 = vmatprep.subr.mxu0 0.0
  %2392 = vmatpush1.msra.mxu0 %v2279
  %2393 = vmatprep.subr.mxu0 0.0
  %2394 = vmatpush1.msra.mxu0 %v2280
  %2395 = vmatprep.subr.mxu0 0.0
  %2396 = vmatpush1.msra.mxu0 %v2281
  %2397 = vmatprep.subr.mxu0 0.0
  %2398 = vmatpush1.msra.mxu0 %v2282
  %2399 = vmatprep.subr.mxu0 0.0
  %2400 = vmatpush1.msra.mxu0 %v2283
  %2401 = vmatprep.subr.mxu0 0.0
  %2402 = vmatpush1.msra.mxu0 %v2284
  %2403 = vmatprep.subr.mxu0 0.0
  %2404 = vmatpush1.msra.mxu0 %v2285
  %2405 = vmatprep.subr.mxu0 0.0
  %2406 = vmatpush1.msra.mxu0 %v2286
  %2407 = vmatprep.subr.mxu0 0.0
  %2408 = vmatpush1.msra.mxu0 %v2287
  %2409 = vmatprep.subr.mxu0 0.0
  %2410 = vmatpush1.msra.mxu0 %v2288
  %2411 = vmatprep.subr.mxu0 0.0
  %2412 = vmatpush1.msra.mxu0 %v2289
  %2413 = vmatprep.subr.mxu0 0.0
  %2414 = vmatpush1.msra.mxu0 %v2290
  %2415 = vmatprep.subr.mxu0 0.0
  %2416 = vmatpush1.msra.mxu0 %v2291
  %2417 = vmatprep.subr.mxu0 0.0
  %2418 = vmatpush1.msra.mxu0 %v2292
  %2419 = vmatprep.subr.mxu0 0.0
  %2420 = vmatpush1.msra.mxu0 %v2293
  %2421 = vmatprep.subr.mxu0 0.0
  %2422 = vmatpush1.msra.mxu0 %v2294
  %2423 = vmatprep.subr.mxu0 0.0
  %2424 = vmatpush1.msra.mxu0 %v2295
  %2425 = vmatprep.subr.mxu0 0.0
  %2426 = vmatpush1.msra.mxu0 %v2296
  %2427 = vmatprep.subr.mxu0 0.0
  %2428 = vmatpush1.msra.mxu0 %v2297
  %2429 = vmatprep.subr.mxu0 0.0
  %2430 = vmatpush1.msra.mxu0 %v2298
  %2431 = vmatprep.subr.mxu0 0.0
  %2432 = vmatpush1.msra.mxu0 %v2299
  %2433 = vmatprep.subr.mxu0 0.0
  %2434 = vmatpush1.msra.mxu0 %v2300
  %2435 = vmatprep.subr.mxu0 0.0
  %2436 = vmatpush1.msra.mxu0 %v2301
  %2437 = vmatprep.subr.mxu0 0.0
  %2438 = vmatpush1.msra.mxu0 %v2302
  %2439 = vmatprep.subr.mxu0 0.0
  %2440 = vmatpush1.msra.mxu0 %v2303
  %2441 = vmatprep.subr.mxu0 0.0
  %2442 = vmatpush1.msra.mxu0 %v2304
  %2443 = vmatprep.subr.mxu0 0.0
  %2444 = vmatpush1.msra.mxu0 %v2305
  %2445 = vmatprep.subr.mxu0 0.0
  %2446 = vmatpush1.msra.mxu0 %v2306
  %2447 = vmatprep.subr.mxu0 0.0
  %2448 = vmatpush1.msra.mxu0 %v2307
  %2449 = vmatprep.subr.mxu0 0.0
  %2450 = vmatpush1.msra.mxu0 %v2308
  %2451 = vmatprep.mubr.f32.mxu0 %v2376
  %2452 = vmatmul.mubr.f32.gmra.mrb[0].mxu0 %v2369
  %v2453 = vpop.f32.mrb[0].mxu0
  %v2454 = vadd.f32 %v2330, %v2453
  %v2455 = vpop.f32.mrb[0].mxu0
  %2456 = vdwg.mxu0
  %2457 = vmatprep.subr.mxu0 0.0
  %2458 = vmatpush1.msra.mxu0 %v2309
  %2459 = vmatprep.subr.mxu0 0.0
  %2460 = vmatpush1.msra.mxu0 %v2310
  %2461 = vmatprep.subr.mxu0 0.0
  %2462 = vmatpush1.msra.mxu0 %v2311
  %2463 = vmatprep.subr.mxu0 0.0
  %2464 = vmatpush1.msra.mxu0 %v2312
  %2465 = vmatprep.subr.mxu0 0.0
  %2466 = vmatpush1.msra.mxu0 %v2313
  %2467 = vmatprep.subr.mxu0 0.0
  %2468 = vmatpush1.msra.mxu0 %v2314
  %2469 = vmatprep.subr.mxu0 0.0
  %2470 = vmatpush1.msra.mxu0 %v2315
  %2471 = vmatprep.subr.mxu0 0.0
  %2472 = vmatpush1.msra.mxu0 %v2316
  %2473 = vmatprep.subr.mxu0 0.0
  %2474 = vmatpush1.msra.mxu0 %v2317
  %2475 = vmatprep.subr.mxu0 0.0
  %2476 = vmatpush1.msra.mxu0 %v2318
  %2477 = vmatprep.subr.mxu0 0.0
  %2478 = vmatpush1.msra.mxu0 %v2319
  %2479 = vmatprep.subr.mxu0 0.0
  %2480 = vmatpush1.msra.mxu0 %v2320
  %2481 = vmatprep.subr.mxu0 0.0
  %2482 = vmatpush1.msra.mxu0 %v2321
  %2483 = vmatprep.subr.mxu0 0.0
  %2484 = vmatpush1.msra.mxu0 %v2322
  %2485 = vmatprep.subr.mxu0 0.0
  %2486 = vmatpush1.msra.mxu0 %v2323
  %2487 = vmatprep.subr.mxu0 0.0
  %2488 = vmatpush1.msra.mxu0 %v2324
  %2489 = vmatprep.subr.mxu0 0.0
  %2490 = vmatpush1.msra.mxu0 0.0
  %2491 = vmatprep.subr.mxu0 0.0
  %2492 = vmatpush1.msra.mxu0 0.0
  %2493 = vmatprep.subr.mxu0 0.0
  %2494 = vmatpush1.msra.mxu0 0.0
  %2495 = vmatprep.subr.mxu0 0.0
  %2496 = vmatpush1.msra.mxu0 0.0
  %2497 = vmatprep.subr.mxu0 0.0
  %2498 = vmatpush1.msra.mxu0 0.0
  %2499 = vmatprep.subr.mxu0 0.0
  %2500 = vmatpush1.msra.mxu0 0.0
  %2501 = vmatprep.subr.mxu0 0.0
  %2502 = vmatpush1.msra.mxu0 0.0
  %2503 = vmatprep.subr.mxu0 0.0
  %2504 = vmatpush1.msra.mxu0 0.0
  %2505 = vmatprep.subr.mxu0 0.0
  %2506 = vmatpush1.msra.mxu0 0.0
  %2507 = vmatprep.subr.mxu0 0.0
  %2508 = vmatpush1.msra.mxu0 0.0
  %2509 = vmatprep.subr.mxu0 0.0
  %2510 = vmatpush1.msra.mxu0 0.0
  %2511 = vmatprep.subr.mxu0 0.0
  %2512 = vmatpush1.msra.mxu0 0.0
  %2513 = vmatprep.subr.mxu0 0.0
  %2514 = vmatpush1.msra.mxu0 0.0
  %2515 = vmatprep.subr.mxu0 0.0
  %2516 = vmatpush1.msra.mxu0 0.0
  %2517 = vmatprep.subr.mxu0 0.0
  %2518 = vmatpush1.msra.mxu0 0.0
  %2519 = vmatprep.subr.mxu0 0.0
  %2520 = vmatpush1.msra.mxu0 0.0
  %2521 = vmatprep.mubr.f32.mxu0 0.0
  %2522 = vmatmul.mubr.f32.gmra.mrb[0].mxu0 %v2383
  %v2523 = vpop.f32.mrb[0].mxu0
  %v2524 = vadd.f32 %v2454, %v2523
  %v2525 = vpop.f32.mrb[0].mxu0
  %2526 = vdwg.mxu0
  %2527 = vst [vmem:[%s5] sm:$0xff] %v2524
  // Predicated region
  $region22: #{cnn_multichannel_forward.1} parent=0 // pred_check
    _
  $region23: #{cnn_multichannel_forward.1} parent=0 // pred_check_branch
    %2529 = sbr.rel (0) target = $region25
  $region24: #{cnn_multichannel_forward.1} parent=0 // pred_region
    _
  $region25: #{cnn_multichannel_forward.1} parent=0 // pred_fallthru
    _
  // Predicated region
  $region26: #{cnn_multichannel_forward.1} parent=0 // pred_check
    _
  $region27: #{cnn_multichannel_forward.1} parent=0 // pred_check_branch
    %2531 = sbr.rel (0) target = $region29
  $region28: #{cnn_multichannel_forward.1} parent=0 // pred_region
    _
  $region29: #{cnn_multichannel_forward.1} parent=0 // pred_fallthru
    _

</llo_original>
